<compile_context>
chip_gen: v7x
topology: tpu7x:2x2x1
jax: 0.10.0
libtpu: 0.0.40
codegen_flags: <defaults>
</compile_context>

<pallas_src>
import functools

import jax
import jax.numpy as jnp
from jax.experimental import pallas as pl
from jax.experimental.pallas import tpu as pltpu


def _round_up(x, m):
    return ((x + m - 1) // m) * m


def _pick_batch_tile(B):
    """Batch tile: big enough to amortize per-step overhead, small enough to
    keep >= 2-4 grid steps (v7x megacore) and fit comfortably in VMEM."""
    if B >= 512:
        return min(1024, _round_up(pl.cdiv(B, 4), 256))   # MXU-friendly, >=2-4 steps
    if B >= 16:
        return _round_up(pl.cdiv(B, 2), 8)                 # keep 2 steps when possible
    return _round_up(max(B, 1), 8)                          # tiny batch: one sublane tile


def _batch_spec(rows, cols):
    # Streamed per-batch-tile block (input x and output z).
    return pl.BlockSpec((rows, cols), lambda i: (i, 0))


def _resident_spec(shape):
    # Constant-index block (weights / biases): stays VMEM-resident across the
    # whole grid; a single pipeline buffer is enough.
    idx = lambda i: (0,) * len(shape)
    try:
        return pl.BlockSpec(shape, idx, pipeline_mode=pl.Buffered(1))
    except (TypeError, AttributeError):   # older jax without pipeline_mode
        return pl.BlockSpec(shape, idx)


def _mlp_kernel(x_ref, w1_ref, b1_ref, w2_ref, b2_ref, w3_ref, b3_ref, o_ref):
    # fc1 + ReLU   (matmul operands bf16, accumulate f32, elementwise f32)
    h1 = jnp.dot(x_ref[...].astype(jnp.bfloat16), w1_ref[...],
                 preferred_element_type=jnp.float32)
    h1 = jnp.maximum(h1 + b1_ref[...], 0.0)
    # fc2 + ReLU
    h2 = jnp.dot(h1.astype(jnp.bfloat16), w2_ref[...],
                 preferred_element_type=jnp.float32)
    h2 = jnp.maximum(h2 + b2_ref[...], 0.0)
    # fc3 + ReLU
    h3 = jnp.dot(h2.astype(jnp.bfloat16), w3_ref[...],
                 preferred_element_type=jnp.float32)
    h3 = jnp.maximum(h3 + b3_ref[...], 0.0)
    o_ref[...] = h3.astype(o_ref.dtype)


@jax.jit
def encoder_mlp_forward(x_nchw, params):
    """x_nchw: (B, 1, 32, 32) float32 (or bfloat16) -> (B, 128) float32."""
    B = x_nchw.shape[0]
    # Same flatten order as torch.flatten(x, 1).
    x_flat = x_nchw.reshape(B, -1)            # (B, 1024), dtype preserved

    w1, b1, w2, b2, w3, b3 = (
        params["w1"], params["b1"], params["w2"],
        params["b2"], params["w3"], params["b3"],
    )
    D_in, H1 = w1.shape       # 1024, 512
    H2 = w2.shape[1]          # 256
    H3 = w3.shape[1]          # 128

    TB = _pick_batch_tile(B)
    grid = (pl.cdiv(B, TB),)                  # partial last block handled by Pallas

    # Footprint at TB=1024: ~8 MiB double-buffered f32 x tile + ~3 MiB f32
    # intermediates + ~1.3 MiB bf16 weights + ~1 MiB output tiles.
    vmem_limit = (32 << 20) if TB >= 512 else (16 << 20)

    out = pl.pallas_call(
        _mlp_kernel,
        out_shape=jax.ShapeDtypeStruct((B, H3), jnp.float32),
        grid_spec=pltpu.PrefetchScalarGridSpec(
            num_scalar_prefetch=0,
            grid=grid,
            in_specs=[
                _batch_spec(TB, D_in),                         # x: streamed
                _resident_spec((D_in, H1)), _resident_spec((1, H1)),   # w1, b1
                _resident_spec((H1, H2)),   _resident_spec((1, H2)),   # w2, b2
                _resident_spec((H2, H3)),   _resident_spec((1, H3)),   # w3, b3
            ],
            out_specs=_batch_spec(TB, H3),
        ),
        compiler_params=pltpu.CompilerParams(
            dimension_semantics=("parallel",),   # megacore shard on v7x; no-op v5e/v6e
            vmem_limit_bytes=vmem_limit,
        ),
    )(x_flat, w1, b1, w2, b2, w3, b3)
    return out
    # TODO(synk): for the repeated tiny-batch inference path, add a P10
    # cross-call weight prefetch (prior pallas_call starts the ~1.3 MiB w1/w2/w3
    # DMAs and returns SEMAPHORE + VMEM handles consumed here) to hide the
    # weight DMA that dominates the B<=256 critical path.


def init_params(key):
    """Matches the PyTorch module's init:
       kaiming_normal_(nonlinearity='relu') on weights (std = sqrt(2/fan_in)),
       zeros on biases.  Weights stored transposed as (in, out) in bfloat16
       (MXU operands); biases kept f32 (elementwise math stays f32 in-kernel)."""
    dims = [(32 * 32, 512), (512, 256), (256, 128)]
    params = {}
    keys = jax.random.split(key, len(dims))
    for i, ((fan_in, fan_out), k) in enumerate(zip(dims, keys), start=1):
        std = (2.0 / fan_in) ** 0.5
        # PyTorch weight is (out, in); sample (out, in), transpose to (in, out).
        w_out_in = std * jax.random.normal(k, (fan_out, fan_in), dtype=jnp.float32)
        params[f"w{i}"] = jnp.transpose(w_out_in).astype(jnp.bfloat16)
        params[f"b{i}"] = jnp.zeros((1, fan_out), jnp.float32)
    return params


def _reference_forward(x_nchw, params):
    """Plain-JAX reference with identical bf16-operand / f32-accumulate math."""
    xf = x_nchw.reshape(x_nchw.shape[0], -1)
    h = xf
    for i in (1, 2, 3):
        h = jnp.dot(h.astype(jnp.bfloat16), params[f"w{i}"],
                    preferred_element_type=jnp.float32)
        h = jnp.maximum(h + params[f"b{i}"], 0.0)
    return h


if __name__ == "__main__":
    key = jax.random.PRNGKey(0)
    pkey, xkey = jax.random.split(key)

    params = init_params(pkey)

    # Small batch; 1x32x32 input consistent with the 32*32 flatten in the module.
    B = 2
    x = jax.random.normal(xkey, (B, 1, 32, 32), dtype=jnp.float32)

    z = encoder_mlp_forward(x, params)
    z = jax.block_until_ready(z)

    ref = _reference_forward(x, params)

    assert z.shape == (B, 128)
    assert jnp.allclose(z, ref, atol=1e-2, rtol=1e-2)

    print("KERNEL_OK")
</pallas_src>

<mosaic_0001>
module attributes {stable_mosaic.version = 11 : i64} {
  func.func @_mlp_kernel(%arg0: i32, %arg1: memref<8x1024xf32, #tpu.memory_space<vmem>>, %arg2: memref<1024x512xbf16, #tpu.memory_space<vmem>>, %arg3: memref<1x512xf32, #tpu.memory_space<vmem>>, %arg4: memref<512x256xbf16, #tpu.memory_space<vmem>>, %arg5: memref<1x256xf32, #tpu.memory_space<vmem>>, %arg6: memref<256x128xbf16, #tpu.memory_space<vmem>>, %arg7: memref<1x128xf32, #tpu.memory_space<vmem>>, %arg8: memref<8x128xf32, #tpu.memory_space<vmem>>) attributes {dimension_semantics = [#tpu.dimension_semantics<parallel>], iteration_bounds = array<i64: 1>, scalar_prefetch = 0 : i64, scratch_operands = 0 : i64, tpu.core_type = #tpu.core_type<tc>, window_params = [{transform_indices = @transform_0, window_bounds = array<i64: 8, 1024>}, {pipeline_mode = #tpu.pipeline_mode<synchronous>, transform_indices = @transform_1, window_bounds = array<i64: 1024, 512>}, {pipeline_mode = #tpu.pipeline_mode<synchronous>, transform_indices = @transform_2, window_bounds = array<i64: 1, 512>}, {pipeline_mode = #tpu.pipeline_mode<synchronous>, transform_indices = @transform_3, window_bounds = array<i64: 512, 256>}, {pipeline_mode = #tpu.pipeline_mode<synchronous>, transform_indices = @transform_4, window_bounds = array<i64: 1, 256>}, {pipeline_mode = #tpu.pipeline_mode<synchronous>, transform_indices = @transform_5, window_bounds = array<i64: 256, 128>}, {pipeline_mode = #tpu.pipeline_mode<synchronous>, transform_indices = @transform_6, window_bounds = array<i64: 1, 128>}, {transform_indices = @transform_7, window_bounds = array<i64: 8, 128>}]} {
    %c0 = arith.constant 0 : index
    %c0_0 = arith.constant 0 : index
    %0 = vector.load %arg1[%c0, %c0_0] : memref<8x1024xf32, #tpu.memory_space<vmem>>, vector<8x1024xf32>
    %1 = arith.truncf %0 : vector<8x1024xf32> to vector<8x1024xbf16>
    %c0_1 = arith.constant 0 : index
    %c0_2 = arith.constant 0 : index
    %2 = vector.load %arg2[%c0_1, %c0_2] : memref<1024x512xbf16, #tpu.memory_space<vmem>>, vector<1024x512xbf16>
    %cst = arith.constant dense<0.000000e+00> : vector<8x512xf32>
    %3 = tpu.matmul %1, %2, %cst {dimension_numbers = #tpu.dot_dimension_numbers<[1], [0], [0], [1], [0, 0, 1, 1], [], []>} : vector<8x1024xbf16>, vector<1024x512xbf16>, vector<8x512xf32> -> vector<8x512xf32>
    %c0_3 = arith.constant 0 : index
    %c0_4 = arith.constant 0 : index
    %4 = vector.load %arg3[%c0_3, %c0_4] : memref<1x512xf32, #tpu.memory_space<vmem>>, vector<1x512xf32>
    %5 = vector.broadcast %4 : vector<1x512xf32> to vector<8x512xf32>
    %6 = arith.addf %3, %5 : vector<8x512xf32>
    %cst_5 = arith.constant 0.000000e+00 : f32
    %7 = vector.broadcast %cst_5 : f32 to vector<8x512xf32>
    %8 = arith.maximumf %6, %7 : vector<8x512xf32>
    %9 = arith.truncf %8 : vector<8x512xf32> to vector<8x512xbf16>
    %c0_6 = arith.constant 0 : index
    %c0_7 = arith.constant 0 : index
    %10 = vector.load %arg4[%c0_6, %c0_7] : memref<512x256xbf16, #tpu.memory_space<vmem>>, vector<512x256xbf16>
    %cst_8 = arith.constant dense<0.000000e+00> : vector<8x256xf32>
    %11 = tpu.matmul %9, %10, %cst_8 {dimension_numbers = #tpu.dot_dimension_numbers<[1], [0], [0], [1], [0, 0, 1, 1], [], []>} : vector<8x512xbf16>, vector<512x256xbf16>, vector<8x256xf32> -> vector<8x256xf32>
    %c0_9 = arith.constant 0 : index
    %c0_10 = arith.constant 0 : index
    %12 = vector.load %arg5[%c0_9, %c0_10] : memref<1x256xf32, #tpu.memory_space<vmem>>, vector<1x256xf32>
    %13 = vector.broadcast %12 : vector<1x256xf32> to vector<8x256xf32>
    %14 = arith.addf %11, %13 : vector<8x256xf32>
    %cst_11 = arith.constant 0.000000e+00 : f32
    %15 = vector.broadcast %cst_11 : f32 to vector<8x256xf32>
    %16 = arith.maximumf %14, %15 : vector<8x256xf32>
    %17 = arith.truncf %16 : vector<8x256xf32> to vector<8x256xbf16>
    %c0_12 = arith.constant 0 : index
    %c0_13 = arith.constant 0 : index
    %18 = vector.load %arg6[%c0_12, %c0_13] : memref<256x128xbf16, #tpu.memory_space<vmem>>, vector<256x128xbf16>
    %cst_14 = arith.constant dense<0.000000e+00> : vector<8x128xf32>
    %19 = tpu.matmul %17, %18, %cst_14 {dimension_numbers = #tpu.dot_dimension_numbers<[1], [0], [0], [1], [0, 0, 1, 1], [], []>} : vector<8x256xbf16>, vector<256x128xbf16>, vector<8x128xf32> -> vector<8x128xf32>
    %c0_15 = arith.constant 0 : index
    %c0_16 = arith.constant 0 : index
    %20 = vector.load %arg7[%c0_15, %c0_16] : memref<1x128xf32, #tpu.memory_space<vmem>>, vector<1x128xf32>
    %21 = vector.broadcast %20 : vector<1x128xf32> to vector<8x128xf32>
    %22 = arith.addf %19, %21 : vector<8x128xf32>
    %cst_17 = arith.constant 0.000000e+00 : f32
    %23 = vector.broadcast %cst_17 : f32 to vector<8x128xf32>
    %24 = arith.maximumf %22, %23 : vector<8x128xf32>
    %c0_18 = arith.constant 0 : index
    %c0_19 = arith.constant 0 : index
    %25 = vector.load %arg8[%c0_18, %c0_19] : memref<8x128xf32, #tpu.memory_space<vmem>>, vector<8x128xf32>
    tpu.vector_store %arg8[%c0_18, %c0_19], %24 {strides = array<i32>} : memref<8x128xf32, #tpu.memory_space<vmem>>, vector<8x128xf32>,
    return
  }
  func.func @transform_0(%arg0: i32) -> (i32, i32) {
    %c0_i32 = arith.constant 0 : i32
    %c0_i32_0 = arith.constant 0 : i32
    return %arg0, %c0_i32 : i32, i32
  }
  func.func @transform_1(%arg0: i32) -> (i32, i32) {
    %c0_i32 = arith.constant 0 : i32
    %c0_i32_0 = arith.constant 0 : i32
    %c0_i32_1 = arith.constant 0 : i32
    return %c0_i32, %c0_i32_0 : i32, i32
  }
  func.func @transform_2(%arg0: i32) -> (i32, i32) {
    %c0_i32 = arith.constant 0 : i32
    %c0_i32_0 = arith.constant 0 : i32
    %c0_i32_1 = arith.constant 0 : i32
    return %c0_i32, %c0_i32_0 : i32, i32
  }
  func.func @transform_3(%arg0: i32) -> (i32, i32) {
    %c0_i32 = arith.constant 0 : i32
    %c0_i32_0 = arith.constant 0 : i32
    %c0_i32_1 = arith.constant 0 : i32
    return %c0_i32, %c0_i32_0 : i32, i32
  }
  func.func @transform_4(%arg0: i32) -> (i32, i32) {
    %c0_i32 = arith.constant 0 : i32
    %c0_i32_0 = arith.constant 0 : i32
    %c0_i32_1 = arith.constant 0 : i32
    return %c0_i32, %c0_i32_0 : i32, i32
  }
  func.func @transform_5(%arg0: i32) -> (i32, i32) {
    %c0_i32 = arith.constant 0 : i32
    %c0_i32_0 = arith.constant 0 : i32
    %c0_i32_1 = arith.constant 0 : i32
    return %c0_i32, %c0_i32_0 : i32, i32
  }
  func.func @transform_6(%arg0: i32) -> (i32, i32) {
    %c0_i32 = arith.constant 0 : i32
    %c0_i32_0 = arith.constant 0 : i32
    %c0_i32_1 = arith.constant 0 : i32
    return %c0_i32, %c0_i32_0 : i32, i32
  }
  func.func @transform_7(%arg0: i32) -> (i32, i32) {
    %c0_i32 = arith.constant 0 : i32
    %c0_i32_0 = arith.constant 0 : i32
    return %arg0, %c0_i32 : i32, i32
  }
}

</mosaic_0001>

<llo_original>
// kernel: encoder_mlp_forward.1
$region0: #{encoder_mlp_forward.1}
  #allocation0 [shape = 'u32[]', space=smem, size = 0x4, offset = 0x4, fixed_abs, tag = 'smem constant byte address 0x4 - core index']
  #allocation1 [shape = 'u32[144,128]{1,0:T(1,128)}', space=vmem, size = 0x12000, scoped, tag = 'internal scratch']
  %s0 = inlined_call_operand.vmem [shape: f32[2,1024], index: 0, kind: input, shape index: {}]
  %s1 = inlined_call_operand.hbm [shape: bf16[1024,512], index: 1, kind: input, shape index: {}]
  %s2 = inlined_call_operand.vmem [shape: f32[1,512], index: 2, kind: input, shape index: {}]
  %s3 = inlined_call_operand.hbm [shape: bf16[512,256], index: 3, kind: input, shape index: {}]
  %s4 = inlined_call_operand.vmem [shape: f32[1,256], index: 4, kind: input, shape index: {}]
  %s5 = inlined_call_operand.hbm [shape: bf16[256,128], index: 5, kind: input, shape index: {}]
  %s6 = inlined_call_operand.vmem [shape: f32[1,128], index: 6, kind: input, shape index: {}]
  %s7 = inlined_call_operand.hbm [shape: f32[2,128], index: 7, kind: output, shape index: {}]
  %s8 = sld [smem:[#allocation0]]
  $region50: #{encoder_mlp_forward.1} parent=0
    _
  %s10 = ssub.s32 1, %s8
  %s11 = scalar_select 0, %s10, %s8
  $region1: #{encoder_mlp_forward.1} parent=0
    #allocation2 [shape = 'u8[1048576]{0}', space=vmem, size = 0x100000, scoped, tag = 'input window, operand 1, single buffered']
    #allocation3 [shape = 's32[1]{0}', space=sflag, size = 0x4, scoped, tag = 'scoped memory for encoder_mlp_forward.1']
    #allocation4 [shape = 's32[1]{0}', space=sflag, size = 0x4, scoped, tag = 'scoped memory for encoder_mlp_forward.1']
    #allocation5 [shape = 'u8[262144]{0}', space=vmem, size = 0x40000, scoped, tag = 'input window, operand 3, single buffered']
    #allocation6 [shape = 's32[1]{0}', space=sflag, size = 0x4, scoped, tag = 'scoped memory for encoder_mlp_forward.1']
    #allocation7 [shape = 'u8[65536]{0}', space=vmem, size = 0x10000, scoped, tag = 'input window, operand 5, single buffered']
    #allocation8 [shape = 'u8[4096]{0}', space=vmem, size = 0x1000, scoped, tag = 'output window, operand 0, single buffered']
    %12 = vsyncpa [#allocation3], 0
    %13 = vsyncpa [#allocation6], 0
    %14 = vsyncpa [#allocation4], 0
    // Predicated region
    $region2: #{encoder_mlp_forward.1} parent=1 // pred_check
      _
    $region3: #{encoder_mlp_forward.1} parent=1 // pred_check_branch
      %16 = sbr.rel (0) target = $region5
    $region4: #{encoder_mlp_forward.1} parent=1 // pred_region
      _
    $region5: #{encoder_mlp_forward.1} parent=1 // pred_fallthru
      _
    // Predicated region
    $region6: #{encoder_mlp_forward.1} parent=1 // pred_check
      _
    $region7: #{encoder_mlp_forward.1} parent=1 // pred_check_branch
      %18 = sbr.rel (0) target = $region9
    $region8: #{encoder_mlp_forward.1} parent=1 // pred_region
      %s20 = ssub.s32 32768, 32768
      %21 = vsyncadd [#allocation3], %s20
      %s22 = sshll.u32 [#allocation2], 4
      %s23 = int_to_ptr.vmem [resolvable:$true] %s22
      %28 = dma.hbm_to_vmem [thread:$0]  %s1, 32768, %s23, [#allocation3], 256, 256, 16
    $region9: #{encoder_mlp_forward.1} parent=1 // pred_fallthru
      _
    // Predicated region
    $region10: #{encoder_mlp_forward.1} parent=1 // pred_check
      _
    $region11: #{encoder_mlp_forward.1} parent=1 // pred_check_branch
      %30 = sbr.rel (0) target = $region13
    $region12: #{encoder_mlp_forward.1} parent=1 // pred_region
      _
    $region13: #{encoder_mlp_forward.1} parent=1 // pred_fallthru
      _
    // Predicated region
    $region14: #{encoder_mlp_forward.1} parent=1 // pred_check
      _
    $region15: #{encoder_mlp_forward.1} parent=1 // pred_check_branch
      %32 = sbr.rel (0) target = $region17
    $region16: #{encoder_mlp_forward.1} parent=1 // pred_region
      %s34 = ssub.s32 8192, 8192
      %35 = vsyncadd [#allocation6], %s34
      %s36 = sshll.u32 [#allocation5], 4
      %s37 = int_to_ptr.vmem [resolvable:$true] %s36
      %42 = dma.hbm_to_vmem [thread:$0]  %s3, 8192, %s37, [#allocation6], 128, 128, 8
    $region17: #{encoder_mlp_forward.1} parent=1 // pred_fallthru
      _
    // Predicated region
    $region18: #{encoder_mlp_forward.1} parent=1 // pred_check
      _
    $region19: #{encoder_mlp_forward.1} parent=1 // pred_check_branch
      %44 = sbr.rel (0) target = $region21
    $region20: #{encoder_mlp_forward.1} parent=1 // pred_region
      _
    $region21: #{encoder_mlp_forward.1} parent=1 // pred_fallthru
      _
    // Predicated region
    $region22: #{encoder_mlp_forward.1} parent=1 // pred_check
      _
    $region23: #{encoder_mlp_forward.1} parent=1 // pred_check_branch
      %46 = sbr.rel (0) target = $region25
    $region24: #{encoder_mlp_forward.1} parent=1 // pred_region
      %s48 = ssub.s32 2048, 2048
      %49 = vsyncadd [#allocation6], %s48
      %s50 = sshll.u32 [#allocation7], 4
      %s51 = int_to_ptr.vmem [resolvable:$true] %s50
      %56 = dma.hbm_to_vmem [thread:$0]  %s5, 2048, %s51, [#allocation6], 64, 64, 4
    $region25: #{encoder_mlp_forward.1} parent=1 // pred_fallthru
      _
    // Predicated region
    $region26: #{encoder_mlp_forward.1} parent=1 // pred_check
      _
    $region27: #{encoder_mlp_forward.1} parent=1 // pred_check_branch
      %58 = sbr.rel (0) target = $region29
    $region28: #{encoder_mlp_forward.1} parent=1 // pred_region
      _
    $region29: #{encoder_mlp_forward.1} parent=1 // pred_fallthru
      _
    // Predicated region
    $region30: #{encoder_mlp_forward.1} parent=1 // pred_check
      _
    $region31: #{encoder_mlp_forward.1} parent=1 // pred_check_branch
      %60 = sbr.rel (0) target = $region33
    $region32: #{encoder_mlp_forward.1} parent=1 // pred_region
      %61 = dma.done [#allocation3], 32768
    $region33: #{encoder_mlp_forward.1} parent=1 // pred_fallthru
      _
    // Predicated region
    $region34: #{encoder_mlp_forward.1} parent=1 // pred_check
      _
    $region35: #{encoder_mlp_forward.1} parent=1 // pred_check_branch
      %63 = sbr.rel (0) target = $region37
    $region36: #{encoder_mlp_forward.1} parent=1 // pred_region
      %64 = dma.done [#allocation6], 8192
    $region37: #{encoder_mlp_forward.1} parent=1 // pred_fallthru
      _
    // Predicated region
    $region38: #{encoder_mlp_forward.1} parent=1 // pred_check
      _
    $region39: #{encoder_mlp_forward.1} parent=1 // pred_check_branch
      %66 = sbr.rel (0) target = $region41
    $region40: #{encoder_mlp_forward.1} parent=1 // pred_region
      %67 = dma.done [#allocation6], 2048
    $region41: #{encoder_mlp_forward.1} parent=1 // pred_fallthru
      _
    %v69 = vld [vmem:[%s0] sm:$0xff]
    %v70 = vld [vmem:[%s0 + $0x8] sm:$0xff]
    %v71 = vld [vmem:[%s0 + $0x10] sm:$0xff]
    %v72 = vld [vmem:[%s0 + $0x18] sm:$0xff]
    %v73 = vld [vmem:[%s0 + $0x20] sm:$0xff]
    %v74 = vld [vmem:[%s0 + $0x28] sm:$0xff]
    %v75 = vld [vmem:[%s0 + $0x30] sm:$0xff]
    %v76 = vld [vmem:[%s0 + $0x38] sm:$0xff]
    %v85 = vcombine.low %v69, %v71
    %v86 = vcombine.high %v69, %v71
    %v87 = vcombine.low %v73, %v75
    %v88 = vcombine.high %v73, %v75
    %v90 = vunpack.c.l.s4 1983009808
    %v91 = vunpack.c.0.s8 %v90
    %v92 = vlaneseq
    %v93 = vshrl.u32 %v92, 7
    %v94 = vsub.s32 %v91, %v93
    %v95 = vrot.slane %v85, %v94
    %v97 = vunpack.c.l.s4 1983009808
    %v98 = vunpack.c.0.s8 %v97
    %v99 = vlaneseq
    %v100 = vshrl.u32 %v99, 7
    %v101 = vsub.s32 %v98, %v100
    %v102 = vrot.slane %v86, %v101
    %v104 = vunpack.c.l.s4 1983009808
    %v105 = vunpack.c.0.s8 %v104
    %v106 = vlaneseq
    %v107 = vshrl.u32 %v106, 7
    %v108 = vsub.s32 %v105, %v107
    %v109 = vrot.slane %v87, %v108
    %v111 = vunpack.c.l.s4 1983009808
    %v112 = vunpack.c.0.s8 %v111
    %v113 = vlaneseq
    %v114 = vshrl.u32 %v113, 7
    %v115 = vsub.s32 %v112, %v114
    %v116 = vrot.slane %v88, %v115
    %v117 = vcombine.low %v95, %v109
    %v118 = vcombine.high %v95, %v109
    %v119 = vcombine.low %v102, %v116
    %v120 = vcombine.high %v102, %v116
    %v121 = vcombine.low %v70, %v72
    %v122 = vcombine.high %v70, %v72
    %v123 = vcombine.low %v74, %v76
    %v124 = vcombine.high %v74, %v76
    %v126 = vunpack.c.l.s4 1983009808
    %v127 = vunpack.c.0.s8 %v126
    %v128 = vlaneseq
    %v129 = vshrl.u32 %v128, 7
    %v130 = vsub.s32 %v127, %v129
    %v131 = vrot.slane %v121, %v130
    %v133 = vunpack.c.l.s4 1983009808
    %v134 = vunpack.c.0.s8 %v133
    %v135 = vlaneseq
    %v136 = vshrl.u32 %v135, 7
    %v137 = vsub.s32 %v134, %v136
    %v138 = vrot.slane %v122, %v137
    %v140 = vunpack.c.l.s4 1983009808
    %v141 = vunpack.c.0.s8 %v140
    %v142 = vlaneseq
    %v143 = vshrl.u32 %v142, 7
    %v144 = vsub.s32 %v141, %v143
    %v145 = vrot.slane %v123, %v144
    %v147 = vunpack.c.l.s4 1983009808
    %v148 = vunpack.c.0.s8 %v147
    %v149 = vlaneseq
    %v150 = vshrl.u32 %v149, 7
    %v151 = vsub.s32 %v148, %v150
    %v152 = vrot.slane %v124, %v151
    %v153 = vcombine.low %v131, %v145
    %v154 = vcombine.high %v131, %v145
    %v155 = vcombine.low %v138, %v152
    %v156 = vcombine.high %v138, %v152
    %v165 = vpack.c.bf16 %v117, %v117
    %v166 = vpack.c.bf16 %v118, %v118
    %v167 = vpack.c.bf16 %v119, %v119
    %v168 = vpack.c.bf16 %v120, %v120
    %v169 = vpack.c.bf16 %v153, %v153
    %v170 = vpack.c.bf16 %v154, %v154
    %v171 = vpack.c.bf16 %v155, %v155
    %v172 = vpack.c.bf16 %v156, %v156
    %v173 = vld [vmem:[#allocation2] sm:$0xff]
    %v174 = vld [vmem:[#allocation2 + $0x8] sm:$0xff]
    %v175 = vld [vmem:[#allocation2 + $0x10] sm:$0xff]
    %v176 = vld [vmem:[#allocation2 + $0x18] sm:$0xff]
    %v177 = vld [vmem:[#allocation2 + $0x20] sm:$0xff]
    %v178 = vld [vmem:[#allocation2 + $0x28] sm:$0xff]
    %v179 = vld [vmem:[#allocation2 + $0x30] sm:$0xff]
    %v180 = vld [vmem:[#allocation2 + $0x38] sm:$0xff]
    %v181 = vld [vmem:[#allocation2 + $0x40] sm:$0xff]
    %v182 = vld [vmem:[#allocation2 + $0x48] sm:$0xff]
    %v183 = vld [vmem:[#allocation2 + $0x50] sm:$0xff]
    %v184 = vld [vmem:[#allocation2 + $0x58] sm:$0xff]
    %v185 = vld [vmem:[#allocation2 + $0x60] sm:$0xff]
    %v186 = vld [vmem:[#allocation2 + $0x68] sm:$0xff]
    %v187 = vld [vmem:[#allocation2 + $0x70] sm:$0xff]
    %v188 = vld [vmem:[#allocation2 + $0x78] sm:$0xff]
    %v189 = vld [vmem:[#allocation2 + $0x80] sm:$0xff]
    %v190 = vld [vmem:[#allocation2 + $0x88] sm:$0xff]
    %v191 = vld [vmem:[#allocation2 + $0x90] sm:$0xff]
    %v192 = vld [vmem:[#allocation2 + $0x98] sm:$0xff]
    %v193 = vld [vmem:[#allocation2 + $0xa0] sm:$0xff]
    %v194 = vld [vmem:[#allocation2 + $0xa8] sm:$0xff]
    %v195 = vld [vmem:[#allocation2 + $0xb0] sm:$0xff]
    %v196 = vld [vmem:[#allocation2 + $0xb8] sm:$0xff]
    %v197 = vld [vmem:[#allocation2 + $0xc0] sm:$0xff]
    %v198 = vld [vmem:[#allocation2 + $0xc8] sm:$0xff]
    %v199 = vld [vmem:[#allocation2 + $0xd0] sm:$0xff]
    %v200 = vld [vmem:[#allocation2 + $0xd8] sm:$0xff]
    %v201 = vld [vmem:[#allocation2 + $0xe0] sm:$0xff]
    %v202 = vld [vmem:[#allocation2 + $0xe8] sm:$0xff]
    %v203 = vld [vmem:[#allocation2 + $0xf0] sm:$0xff]
    %v204 = vld [vmem:[#allocation2 + $0xf8] sm:$0xff]
    %v205 = vld [vmem:[#allocation2 + $0x100] sm:$0xff]
    %v206 = vld [vmem:[#allocation2 + $0x108] sm:$0xff]
    %v207 = vld [vmem:[#allocation2 + $0x110] sm:$0xff]
    %v208 = vld [vmem:[#allocation2 + $0x118] sm:$0xff]
    %v209 = vld [vmem:[#allocation2 + $0x120] sm:$0xff]
    %v210 = vld [vmem:[#allocation2 + $0x128] sm:$0xff]
    %v211 = vld [vmem:[#allocation2 + $0x130] sm:$0xff]
    %v212 = vld [vmem:[#allocation2 + $0x138] sm:$0xff]
    %v213 = vld [vmem:[#allocation2 + $0x140] sm:$0xff]
    %v214 = vld [vmem:[#allocation2 + $0x148] sm:$0xff]
    %v215 = vld [vmem:[#allocation2 + $0x150] sm:$0xff]
    %v216 = vld [vmem:[#allocation2 + $0x158] sm:$0xff]
    %v217 = vld [vmem:[#allocation2 + $0x160] sm:$0xff]
    %v218 = vld [vmem:[#allocation2 + $0x168] sm:$0xff]
    %v219 = vld [vmem:[#allocation2 + $0x170] sm:$0xff]
    %v220 = vld [vmem:[#allocation2 + $0x178] sm:$0xff]
    %v221 = vld [vmem:[#allocation2 + $0x180] sm:$0xff]
    %v222 = vld [vmem:[#allocation2 + $0x188] sm:$0xff]
    %v223 = vld [vmem:[#allocation2 + $0x190] sm:$0xff]
    %v224 = vld [vmem:[#allocation2 + $0x198] sm:$0xff]
    %v225 = vld [vmem:[#allocation2 + $0x1a0] sm:$0xff]
    %v226 = vld [vmem:[#allocation2 + $0x1a8] sm:$0xff]
    %v227 = vld [vmem:[#allocation2 + $0x1b0] sm:$0xff]
    %v228 = vld [vmem:[#allocation2 + $0x1b8] sm:$0xff]
    %v229 = vld [vmem:[#allocation2 + $0x1c0] sm:$0xff]
    %v230 = vld [vmem:[#allocation2 + $0x1c8] sm:$0xff]
    %v231 = vld [vmem:[#allocation2 + $0x1d0] sm:$0xff]
    %v232 = vld [vmem:[#allocation2 + $0x1d8] sm:$0xff]
    %v233 = vld [vmem:[#allocation2 + $0x1e0] sm:$0xff]
    %v234 = vld [vmem:[#allocation2 + $0x1e8] sm:$0xff]
    %v235 = vld [vmem:[#allocation2 + $0x1f0] sm:$0xff]
    %v236 = vld [vmem:[#allocation2 + $0x1f8] sm:$0xff]
    %v237 = vld [vmem:[#allocation2 + $0x200] sm:$0xff]
    %v238 = vld [vmem:[#allocation2 + $0x208] sm:$0xff]
    %v239 = vld [vmem:[#allocation2 + $0x210] sm:$0xff]
    %v240 = vld [vmem:[#allocation2 + $0x218] sm:$0xff]
    %v241 = vld [vmem:[#allocation2 + $0x220] sm:$0xff]
    %v242 = vld [vmem:[#allocation2 + $0x228] sm:$0xff]
    %v243 = vld [vmem:[#allocation2 + $0x230] sm:$0xff]
    %v244 = vld [vmem:[#allocation2 + $0x238] sm:$0xff]
    %v245 = vld [vmem:[#allocation2 + $0x240] sm:$0xff]
    %v246 = vld [vmem:[#allocation2 + $0x248] sm:$0xff]
    %v247 = vld [vmem:[#allocation2 + $0x250] sm:$0xff]
    %v248 = vld [vmem:[#allocation2 + $0x258] sm:$0xff]
    %v249 = vld [vmem:[#allocation2 + $0x260] sm:$0xff]
    %v250 = vld [vmem:[#allocation2 + $0x268] sm:$0xff]
    %v251 = vld [vmem:[#allocation2 + $0x270] sm:$0xff]
    %v252 = vld [vmem:[#allocation2 + $0x278] sm:$0xff]
    %v253 = vld [vmem:[#allocation2 + $0x280] sm:$0xff]
    %v254 = vld [vmem:[#allocation2 + $0x288] sm:$0xff]
    %v255 = vld [vmem:[#allocation2 + $0x290] sm:$0xff]
    %v256 = vld [vmem:[#allocation2 + $0x298] sm:$0xff]
    %v257 = vld [vmem:[#allocation2 + $0x2a0] sm:$0xff]
    %v258 = vld [vmem:[#allocation2 + $0x2a8] sm:$0xff]
    %v259 = vld [vmem:[#allocation2 + $0x2b0] sm:$0xff]
    %v260 = vld [vmem:[#allocation2 + $0x2b8] sm:$0xff]
    %v261 = vld [vmem:[#allocation2 + $0x2c0] sm:$0xff]
    %v262 = vld [vmem:[#allocation2 + $0x2c8] sm:$0xff]
    %v263 = vld [vmem:[#allocation2 + $0x2d0] sm:$0xff]
    %v264 = vld [vmem:[#allocation2 + $0x2d8] sm:$0xff]
    %v265 = vld [vmem:[#allocation2 + $0x2e0] sm:$0xff]
    %v266 = vld [vmem:[#allocation2 + $0x2e8] sm:$0xff]
    %v267 = vld [vmem:[#allocation2 + $0x2f0] sm:$0xff]
    %v268 = vld [vmem:[#allocation2 + $0x2f8] sm:$0xff]
    %v269 = vld [vmem:[#allocation2 + $0x300] sm:$0xff]
    %v270 = vld [vmem:[#allocation2 + $0x308] sm:$0xff]
    %v271 = vld [vmem:[#allocation2 + $0x310] sm:$0xff]
    %v272 = vld [vmem:[#allocation2 + $0x318] sm:$0xff]
    %v273 = vld [vmem:[#allocation2 + $0x320] sm:$0xff]
    %v274 = vld [vmem:[#allocation2 + $0x328] sm:$0xff]
    %v275 = vld [vmem:[#allocation2 + $0x330] sm:$0xff]
    %v276 = vld [vmem:[#allocation2 + $0x338] sm:$0xff]
    %v277 = vld [vmem:[#allocation2 + $0x340] sm:$0xff]
    %v278 = vld [vmem:[#allocation2 + $0x348] sm:$0xff]
    %v279 = vld [vmem:[#allocation2 + $0x350] sm:$0xff]
    %v280 = vld [vmem:[#allocation2 + $0x358] sm:$0xff]
    %v281 = vld [vmem:[#allocation2 + $0x360] sm:$0xff]
    %v282 = vld [vmem:[#allocation2 + $0x368] sm:$0xff]
    %v283 = vld [vmem:[#allocation2 + $0x370] sm:$0xff]
    %v284 = vld [vmem:[#allocation2 + $0x378] sm:$0xff]
    %v285 = vld [vmem:[#allocation2 + $0x380] sm:$0xff]
    %v286 = vld [vmem:[#allocation2 + $0x388] sm:$0xff]
    %v287 = vld [vmem:[#allocation2 + $0x390] sm:$0xff]
    %v288 = vld [vmem:[#allocation2 + $0x398] sm:$0xff]
    %v289 = vld [vmem:[#allocation2 + $0x3a0] sm:$0xff]
    %v290 = vld [vmem:[#allocation2 + $0x3a8] sm:$0xff]
    %v291 = vld [vmem:[#allocation2 + $0x3b0] sm:$0xff]
    %v292 = vld [vmem:[#allocation2 + $0x3b8] sm:$0xff]
    %v293 = vld [vmem:[#allocation2 + $0x3c0] sm:$0xff]
    %v294 = vld [vmem:[#allocation2 + $0x3c8] sm:$0xff]
    %v295 = vld [vmem:[#allocation2 + $0x3d0] sm:$0xff]
    %v296 = vld [vmem:[#allocation2 + $0x3d8] sm:$0xff]
    %v297 = vld [vmem:[#allocation2 + $0x3e0] sm:$0xff]
    %v298 = vld [vmem:[#allocation2 + $0x3e8] sm:$0xff]
    %v299 = vld [vmem:[#allocation2 + $0x3f0] sm:$0xff]
    %v300 = vld [vmem:[#allocation2 + $0x3f8] sm:$0xff]
    %v301 = vld [vmem:[#allocation2 + $0x400] sm:$0xff]
    %v302 = vld [vmem:[#allocation2 + $0x408] sm:$0xff]
    %v303 = vld [vmem:[#allocation2 + $0x410] sm:$0xff]
    %v304 = vld [vmem:[#allocation2 + $0x418] sm:$0xff]
    %v305 = vld [vmem:[#allocation2 + $0x420] sm:$0xff]
    %v306 = vld [vmem:[#allocation2 + $0x428] sm:$0xff]
    %v307 = vld [vmem:[#allocation2 + $0x430] sm:$0xff]
    %v308 = vld [vmem:[#allocation2 + $0x438] sm:$0xff]
    %v309 = vld [vmem:[#allocation2 + $0x440] sm:$0xff]
    %v310 = vld [vmem:[#allocation2 + $0x448] sm:$0xff]
    %v311 = vld [vmem:[#allocation2 + $0x450] sm:$0xff]
    %v312 = vld [vmem:[#allocation2 + $0x458] sm:$0xff]
    %v313 = vld [vmem:[#allocation2 + $0x460] sm:$0xff]
    %v314 = vld [vmem:[#allocation2 + $0x468] sm:$0xff]
    %v315 = vld [vmem:[#allocation2 + $0x470] sm:$0xff]
    %v316 = vld [vmem:[#allocation2 + $0x478] sm:$0xff]
    %v317 = vld [vmem:[#allocation2 + $0x480] sm:$0xff]
    %v318 = vld [vmem:[#allocation2 + $0x488] sm:$0xff]
    %v319 = vld [vmem:[#allocation2 + $0x490] sm:$0xff]
    %v320 = vld [vmem:[#allocation2 + $0x498] sm:$0xff]
    %v321 = vld [vmem:[#allocation2 + $0x4a0] sm:$0xff]
    %v322 = vld [vmem:[#allocation2 + $0x4a8] sm:$0xff]
    %v323 = vld [vmem:[#allocation2 + $0x4b0] sm:$0xff]
    %v324 = vld [vmem:[#allocation2 + $0x4b8] sm:$0xff]
    %v325 = vld [vmem:[#allocation2 + $0x4c0] sm:$0xff]
    %v326 = vld [vmem:[#allocation2 + $0x4c8] sm:$0xff]
    %v327 = vld [vmem:[#allocation2 + $0x4d0] sm:$0xff]
    %v328 = vld [vmem:[#allocation2 + $0x4d8] sm:$0xff]
    %v329 = vld [vmem:[#allocation2 + $0x4e0] sm:$0xff]
    %v330 = vld [vmem:[#allocation2 + $0x4e8] sm:$0xff]
    %v331 = vld [vmem:[#allocation2 + $0x4f0] sm:$0xff]
    %v332 = vld [vmem:[#allocation2 + $0x4f8] sm:$0xff]
    %v333 = vld [vmem:[#allocation2 + $0x500] sm:$0xff]
    %v334 = vld [vmem:[#allocation2 + $0x508] sm:$0xff]
    %v335 = vld [vmem:[#allocation2 + $0x510] sm:$0xff]
    %v336 = vld [vmem:[#allocation2 + $0x518] sm:$0xff]
    %v337 = vld [vmem:[#allocation2 + $0x520] sm:$0xff]
    %v338 = vld [vmem:[#allocation2 + $0x528] sm:$0xff]
    %v339 = vld [vmem:[#allocation2 + $0x530] sm:$0xff]
    %v340 = vld [vmem:[#allocation2 + $0x538] sm:$0xff]
    %v341 = vld [vmem:[#allocation2 + $0x540] sm:$0xff]
    %v342 = vld [vmem:[#allocation2 + $0x548] sm:$0xff]
    %v343 = vld [vmem:[#allocation2 + $0x550] sm:$0xff]
    %v344 = vld [vmem:[#allocation2 + $0x558] sm:$0xff]
    %v345 = vld [vmem:[#allocation2 + $0x560] sm:$0xff]
    %v346 = vld [vmem:[#allocation2 + $0x568] sm:$0xff]
    %v347 = vld [vmem:[#allocation2 + $0x570] sm:$0xff]
    %v348 = vld [vmem:[#allocation2 + $0x578] sm:$0xff]
    %v349 = vld [vmem:[#allocation2 + $0x580] sm:$0xff]
    %v350 = vld [vmem:[#allocation2 + $0x588] sm:$0xff]
    %v351 = vld [vmem:[#allocation2 + $0x590] sm:$0xff]
    %v352 = vld [vmem:[#allocation2 + $0x598] sm:$0xff]
    %v353 = vld [vmem:[#allocation2 + $0x5a0] sm:$0xff]
    %v354 = vld [vmem:[#allocation2 + $0x5a8] sm:$0xff]
    %v355 = vld [vmem:[#allocation2 + $0x5b0] sm:$0xff]
    %v356 = vld [vmem:[#allocation2 + $0x5b8] sm:$0xff]
    %v357 = vld [vmem:[#allocation2 + $0x5c0] sm:$0xff]
    %v358 = vld [vmem:[#allocation2 + $0x5c8] sm:$0xff]
    %v359 = vld [vmem:[#allocation2 + $0x5d0] sm:$0xff]
    %v360 = vld [vmem:[#allocation2 + $0x5d8] sm:$0xff]
    %v361 = vld [vmem:[#allocation2 + $0x5e0] sm:$0xff]
    %v362 = vld [vmem:[#allocation2 + $0x5e8] sm:$0xff]
    %v363 = vld [vmem:[#allocation2 + $0x5f0] sm:$0xff]
    %v364 = vld [vmem:[#allocation2 + $0x5f8] sm:$0xff]
    %v365 = vld [vmem:[#allocation2 + $0x600] sm:$0xff]
    %v366 = vld [vmem:[#allocation2 + $0x608] sm:$0xff]
    %v367 = vld [vmem:[#allocation2 + $0x610] sm:$0xff]
    %v368 = vld [vmem:[#allocation2 + $0x618] sm:$0xff]
    %v369 = vld [vmem:[#allocation2 + $0x620] sm:$0xff]
    %v370 = vld [vmem:[#allocation2 + $0x628] sm:$0xff]
    %v371 = vld [vmem:[#allocation2 + $0x630] sm:$0xff]
    %v372 = vld [vmem:[#allocation2 + $0x638] sm:$0xff]
    %v373 = vld [vmem:[#allocation2 + $0x640] sm:$0xff]
    %v374 = vld [vmem:[#allocation2 + $0x648] sm:$0xff]
    %v375 = vld [vmem:[#allocation2 + $0x650] sm:$0xff]
    %v376 = vld [vmem:[#allocation2 + $0x658] sm:$0xff]
    %v377 = vld [vmem:[#allocation2 + $0x660] sm:$0xff]
    %v378 = vld [vmem:[#allocation2 + $0x668] sm:$0xff]
    %v379 = vld [vmem:[#allocation2 + $0x670] sm:$0xff]
    %v380 = vld [vmem:[#allocation2 + $0x678] sm:$0xff]
    %v381 = vld [vmem:[#allocation2 + $0x680] sm:$0xff]
    %v382 = vld [vmem:[#allocation2 + $0x688] sm:$0xff]
    %v383 = vld [vmem:[#allocation2 + $0x690] sm:$0xff]
    %v384 = vld [vmem:[#allocation2 + $0x698] sm:$0xff]
    %v385 = vld [vmem:[#allocation2 + $0x6a0] sm:$0xff]
    %v386 = vld [vmem:[#allocation2 + $0x6a8] sm:$0xff]
    %v387 = vld [vmem:[#allocation2 + $0x6b0] sm:$0xff]
    %v388 = vld [vmem:[#allocation2 + $0x6b8] sm:$0xff]
    %v389 = vld [vmem:[#allocation2 + $0x6c0] sm:$0xff]
    %v390 = vld [vmem:[#allocation2 + $0x6c8] sm:$0xff]
    %v391 = vld [vmem:[#allocation2 + $0x6d0] sm:$0xff]
    %v392 = vld [vmem:[#allocation2 + $0x6d8] sm:$0xff]
    %v393 = vld [vmem:[#allocation2 + $0x6e0] sm:$0xff]
    %v394 = vld [vmem:[#allocation2 + $0x6e8] sm:$0xff]
    %v395 = vld [vmem:[#allocation2 + $0x6f0] sm:$0xff]
    %v396 = vld [vmem:[#allocation2 + $0x6f8] sm:$0xff]
    %v397 = vld [vmem:[#allocation2 + $0x700] sm:$0xff]
    %v398 = vld [vmem:[#allocation2 + $0x708] sm:$0xff]
    %v399 = vld [vmem:[#allocation2 + $0x710] sm:$0xff]
    %v400 = vld [vmem:[#allocation2 + $0x718] sm:$0xff]
    %v401 = vld [vmem:[#allocation2 + $0x720] sm:$0xff]
    %v402 = vld [vmem:[#allocation2 + $0x728] sm:$0xff]
    %v403 = vld [vmem:[#allocation2 + $0x730] sm:$0xff]
    %v404 = vld [vmem:[#allocation2 + $0x738] sm:$0xff]
    %v405 = vld [vmem:[#allocation2 + $0x740] sm:$0xff]
    %v406 = vld [vmem:[#allocation2 + $0x748] sm:$0xff]
    %v407 = vld [vmem:[#allocation2 + $0x750] sm:$0xff]
    %v408 = vld [vmem:[#allocation2 + $0x758] sm:$0xff]
    %v409 = vld [vmem:[#allocation2 + $0x760] sm:$0xff]
    %v410 = vld [vmem:[#allocation2 + $0x768] sm:$0xff]
    %v411 = vld [vmem:[#allocation2 + $0x770] sm:$0xff]
    %v412 = vld [vmem:[#allocation2 + $0x778] sm:$0xff]
    %v413 = vld [vmem:[#allocation2 + $0x780] sm:$0xff]
    %v414 = vld [vmem:[#allocation2 + $0x788] sm:$0xff]
    %v415 = vld [vmem:[#allocation2 + $0x790] sm:$0xff]
    %v416 = vld [vmem:[#allocation2 + $0x798] sm:$0xff]
    %v417 = vld [vmem:[#allocation2 + $0x7a0] sm:$0xff]
    %v418 = vld [vmem:[#allocation2 + $0x7a8] sm:$0xff]
    %v419 = vld [vmem:[#allocation2 + $0x7b0] sm:$0xff]
    %v420 = vld [vmem:[#allocation2 + $0x7b8] sm:$0xff]
    %v421 = vld [vmem:[#allocation2 + $0x7c0] sm:$0xff]
    %v422 = vld [vmem:[#allocation2 + $0x7c8] sm:$0xff]
    %v423 = vld [vmem:[#allocation2 + $0x7d0] sm:$0xff]
    %v424 = vld [vmem:[#allocation2 + $0x7d8] sm:$0xff]
    %v425 = vld [vmem:[#allocation2 + $0x7e0] sm:$0xff]
    %v426 = vld [vmem:[#allocation2 + $0x7e8] sm:$0xff]
    %v427 = vld [vmem:[#allocation2 + $0x7f0] sm:$0xff]
    %v428 = vld [vmem:[#allocation2 + $0x7f8] sm:$0xff]
    %v429 = vld [vmem:[%s2] sm:$0xf]
    %v431 = vlaneseq
    %v432 = vshrl.u32 %v431, 7
    %v433 = vsub.s32 0, %v432
    %v434 = vrot.slane %v429, %v433
    %v435 = vlaneseq
    %v436 = vshrl.u32 %v435, 7
    %v437 = vsub.s32 1, %v436
    %v438 = vrot.slane %v429, %v437
    %v439 = vlaneseq
    %v440 = vshrl.u32 %v439, 7
    %v441 = vsub.s32 2, %v440
    %v442 = vrot.slane %v429, %v441
    %v443 = vlaneseq
    %v444 = vshrl.u32 %v443, 7
    %v445 = vsub.s32 3, %v444
    %v446 = vrot.slane %v429, %v445
    %v707 = vunpack.c.l.b16 %v173
    %v708 = vunpack.c.h.b16 %v173
    %v709 = vunpack.c.l.b16 %v174
    %v710 = vunpack.c.h.b16 %v174
    %v711 = vunpack.c.l.b16 %v175
    %v712 = vunpack.c.h.b16 %v175
    %v713 = vunpack.c.l.b16 %v176
    %v714 = vunpack.c.h.b16 %v176
    %v715 = vunpack.c.l.b16 %v177
    %v716 = vunpack.c.h.b16 %v177
    %v717 = vunpack.c.l.b16 %v178
    %v718 = vunpack.c.h.b16 %v178
    %v719 = vunpack.c.l.b16 %v179
    %v720 = vunpack.c.h.b16 %v179
    %v721 = vunpack.c.l.b16 %v180
    %v722 = vunpack.c.h.b16 %v180
    %v723 = vunpack.c.l.b16 %v181
    %v724 = vunpack.c.h.b16 %v181
    %v725 = vunpack.c.l.b16 %v182
    %v726 = vunpack.c.h.b16 %v182
    %v727 = vunpack.c.l.b16 %v183
    %v728 = vunpack.c.h.b16 %v183
    %v729 = vunpack.c.l.b16 %v184
    %v730 = vunpack.c.h.b16 %v184
    %v731 = vunpack.c.l.b16 %v185
    %v732 = vunpack.c.h.b16 %v185
    %v733 = vunpack.c.l.b16 %v186
    %v734 = vunpack.c.h.b16 %v186
    %v735 = vunpack.c.l.b16 %v187
    %v736 = vunpack.c.h.b16 %v187
    %v737 = vunpack.c.l.b16 %v188
    %v738 = vunpack.c.h.b16 %v188
    %v739 = vunpack.c.l.b16 %v189
    %v740 = vunpack.c.h.b16 %v189
    %v741 = vunpack.c.l.b16 %v190
    %v742 = vunpack.c.h.b16 %v190
    %v743 = vunpack.c.l.b16 %v191
    %v744 = vunpack.c.h.b16 %v191
    %v745 = vunpack.c.l.b16 %v192
    %v746 = vunpack.c.h.b16 %v192
    %v747 = vunpack.c.l.b16 %v193
    %v748 = vunpack.c.h.b16 %v193
    %v749 = vunpack.c.l.b16 %v194
    %v750 = vunpack.c.h.b16 %v194
    %v751 = vunpack.c.l.b16 %v195
    %v752 = vunpack.c.h.b16 %v195
    %v753 = vunpack.c.l.b16 %v196
    %v754 = vunpack.c.h.b16 %v196
    %v755 = vunpack.c.l.b16 %v197
    %v756 = vunpack.c.h.b16 %v197
    %v757 = vunpack.c.l.b16 %v198
    %v758 = vunpack.c.h.b16 %v198
    %v759 = vunpack.c.l.b16 %v199
    %v760 = vunpack.c.h.b16 %v199
    %v761 = vunpack.c.l.b16 %v200
    %v762 = vunpack.c.h.b16 %v200
    %v763 = vunpack.c.l.b16 %v201
    %v764 = vunpack.c.h.b16 %v201
    %v765 = vunpack.c.l.b16 %v202
    %v766 = vunpack.c.h.b16 %v202
    %v767 = vunpack.c.l.b16 %v203
    %v768 = vunpack.c.h.b16 %v203
    %v769 = vunpack.c.l.b16 %v204
    %v770 = vunpack.c.h.b16 %v204
    %v771 = vunpack.c.l.b16 %v205
    %v772 = vunpack.c.h.b16 %v205
    %v773 = vunpack.c.l.b16 %v206
    %v774 = vunpack.c.h.b16 %v206
    %v775 = vunpack.c.l.b16 %v207
    %v776 = vunpack.c.h.b16 %v207
    %v777 = vunpack.c.l.b16 %v208
    %v778 = vunpack.c.h.b16 %v208
    %v779 = vunpack.c.l.b16 %v209
    %v780 = vunpack.c.h.b16 %v209
    %v781 = vunpack.c.l.b16 %v210
    %v782 = vunpack.c.h.b16 %v210
    %v783 = vunpack.c.l.b16 %v211
    %v784 = vunpack.c.h.b16 %v211
    %v785 = vunpack.c.l.b16 %v212
    %v786 = vunpack.c.h.b16 %v212
    %v787 = vunpack.c.l.b16 %v213
    %v788 = vunpack.c.h.b16 %v213
    %v789 = vunpack.c.l.b16 %v214
    %v790 = vunpack.c.h.b16 %v214
    %v791 = vunpack.c.l.b16 %v215
    %v792 = vunpack.c.h.b16 %v215
    %v793 = vunpack.c.l.b16 %v216
    %v794 = vunpack.c.h.b16 %v216
    %v795 = vunpack.c.l.b16 %v217
    %v796 = vunpack.c.h.b16 %v217
    %v797 = vunpack.c.l.b16 %v218
    %v798 = vunpack.c.h.b16 %v218
    %v799 = vunpack.c.l.b16 %v219
    %v800 = vunpack.c.h.b16 %v219
    %v801 = vunpack.c.l.b16 %v220
    %v802 = vunpack.c.h.b16 %v220
    %v803 = vunpack.c.l.b16 %v221
    %v804 = vunpack.c.h.b16 %v221
    %v805 = vunpack.c.l.b16 %v222
    %v806 = vunpack.c.h.b16 %v222
    %v807 = vunpack.c.l.b16 %v223
    %v808 = vunpack.c.h.b16 %v223
    %v809 = vunpack.c.l.b16 %v224
    %v810 = vunpack.c.h.b16 %v224
    %v811 = vunpack.c.l.b16 %v225
    %v812 = vunpack.c.h.b16 %v225
    %v813 = vunpack.c.l.b16 %v226
    %v814 = vunpack.c.h.b16 %v226
    %v815 = vunpack.c.l.b16 %v227
    %v816 = vunpack.c.h.b16 %v227
    %v817 = vunpack.c.l.b16 %v228
    %v818 = vunpack.c.h.b16 %v228
    %v819 = vunpack.c.l.b16 %v229
    %v820 = vunpack.c.h.b16 %v229
    %v821 = vunpack.c.l.b16 %v230
    %v822 = vunpack.c.h.b16 %v230
    %v823 = vunpack.c.l.b16 %v231
    %v824 = vunpack.c.h.b16 %v231
    %v825 = vunpack.c.l.b16 %v232
    %v826 = vunpack.c.h.b16 %v232
    %v827 = vunpack.c.l.b16 %v233
    %v828 = vunpack.c.h.b16 %v233
    %v829 = vunpack.c.l.b16 %v234
    %v830 = vunpack.c.h.b16 %v234
    %v831 = vunpack.c.l.b16 %v235
    %v832 = vunpack.c.h.b16 %v235
    %v833 = vunpack.c.l.b16 %v236
    %v834 = vunpack.c.h.b16 %v236
    %v835 = vunpack.c.l.b16 %v237
    %v836 = vunpack.c.h.b16 %v237
    %v837 = vunpack.c.l.b16 %v238
    %v838 = vunpack.c.h.b16 %v238
    %v839 = vunpack.c.l.b16 %v239
    %v840 = vunpack.c.h.b16 %v239
    %v841 = vunpack.c.l.b16 %v240
    %v842 = vunpack.c.h.b16 %v240
    %v843 = vunpack.c.l.b16 %v241
    %v844 = vunpack.c.h.b16 %v241
    %v845 = vunpack.c.l.b16 %v242
    %v846 = vunpack.c.h.b16 %v242
    %v847 = vunpack.c.l.b16 %v243
    %v848 = vunpack.c.h.b16 %v243
    %v849 = vunpack.c.l.b16 %v244
    %v850 = vunpack.c.h.b16 %v244
    %v851 = vunpack.c.l.b16 %v245
    %v852 = vunpack.c.h.b16 %v245
    %v853 = vunpack.c.l.b16 %v246
    %v854 = vunpack.c.h.b16 %v246
    %v855 = vunpack.c.l.b16 %v247
    %v856 = vunpack.c.h.b16 %v247
    %v857 = vunpack.c.l.b16 %v248
    %v858 = vunpack.c.h.b16 %v248
    %v859 = vunpack.c.l.b16 %v249
    %v860 = vunpack.c.h.b16 %v249
    %v861 = vunpack.c.l.b16 %v250
    %v862 = vunpack.c.h.b16 %v250
    %v863 = vunpack.c.l.b16 %v251
    %v864 = vunpack.c.h.b16 %v251
    %v865 = vunpack.c.l.b16 %v252
    %v866 = vunpack.c.h.b16 %v252
    %v867 = vunpack.c.l.b16 %v253
    %v868 = vunpack.c.h.b16 %v253
    %v869 = vunpack.c.l.b16 %v254
    %v870 = vunpack.c.h.b16 %v254
    %v871 = vunpack.c.l.b16 %v255
    %v872 = vunpack.c.h.b16 %v255
    %v873 = vunpack.c.l.b16 %v256
    %v874 = vunpack.c.h.b16 %v256
    %v875 = vunpack.c.l.b16 %v257
    %v876 = vunpack.c.h.b16 %v257
    %v877 = vunpack.c.l.b16 %v258
    %v878 = vunpack.c.h.b16 %v258
    %v879 = vunpack.c.l.b16 %v259
    %v880 = vunpack.c.h.b16 %v259
    %v881 = vunpack.c.l.b16 %v260
    %v882 = vunpack.c.h.b16 %v260
    %v883 = vunpack.c.l.b16 %v261
    %v884 = vunpack.c.h.b16 %v261
    %v885 = vunpack.c.l.b16 %v262
    %v886 = vunpack.c.h.b16 %v262
    %v887 = vunpack.c.l.b16 %v263
    %v888 = vunpack.c.h.b16 %v263
    %v889 = vunpack.c.l.b16 %v264
    %v890 = vunpack.c.h.b16 %v264
    %v891 = vunpack.c.l.b16 %v265
    %v892 = vunpack.c.h.b16 %v265
    %v893 = vunpack.c.l.b16 %v266
    %v894 = vunpack.c.h.b16 %v266
    %v895 = vunpack.c.l.b16 %v267
    %v896 = vunpack.c.h.b16 %v267
    %v897 = vunpack.c.l.b16 %v268
    %v898 = vunpack.c.h.b16 %v268
    %v899 = vunpack.c.l.b16 %v269
    %v900 = vunpack.c.h.b16 %v269
    %v901 = vunpack.c.l.b16 %v270
    %v902 = vunpack.c.h.b16 %v270
    %v903 = vunpack.c.l.b16 %v271
    %v904 = vunpack.c.h.b16 %v271
    %v905 = vunpack.c.l.b16 %v272
    %v906 = vunpack.c.h.b16 %v272
    %v907 = vunpack.c.l.b16 %v273
    %v908 = vunpack.c.h.b16 %v273
    %v909 = vunpack.c.l.b16 %v274
    %v910 = vunpack.c.h.b16 %v274
    %v911 = vunpack.c.l.b16 %v275
    %v912 = vunpack.c.h.b16 %v275
    %v913 = vunpack.c.l.b16 %v276
    %v914 = vunpack.c.h.b16 %v276
    %v915 = vunpack.c.l.b16 %v277
    %v916 = vunpack.c.h.b16 %v277
    %v917 = vunpack.c.l.b16 %v278
    %v918 = vunpack.c.h.b16 %v278
    %v919 = vunpack.c.l.b16 %v279
    %v920 = vunpack.c.h.b16 %v279
    %v921 = vunpack.c.l.b16 %v280
    %v922 = vunpack.c.h.b16 %v280
    %v923 = vunpack.c.l.b16 %v281
    %v924 = vunpack.c.h.b16 %v281
    %v925 = vunpack.c.l.b16 %v282
    %v926 = vunpack.c.h.b16 %v282
    %v927 = vunpack.c.l.b16 %v283
    %v928 = vunpack.c.h.b16 %v283
    %v929 = vunpack.c.l.b16 %v284
    %v930 = vunpack.c.h.b16 %v284
    %v931 = vunpack.c.l.b16 %v285
    %v932 = vunpack.c.h.b16 %v285
    %v933 = vunpack.c.l.b16 %v286
    %v934 = vunpack.c.h.b16 %v286
    %v935 = vunpack.c.l.b16 %v287
    %v936 = vunpack.c.h.b16 %v287
    %v937 = vunpack.c.l.b16 %v288
    %v938 = vunpack.c.h.b16 %v288
    %v939 = vunpack.c.l.b16 %v289
    %v940 = vunpack.c.h.b16 %v289
    %v941 = vunpack.c.l.b16 %v290
    %v942 = vunpack.c.h.b16 %v290
    %v943 = vunpack.c.l.b16 %v291
    %v944 = vunpack.c.h.b16 %v291
    %v945 = vunpack.c.l.b16 %v292
    %v946 = vunpack.c.h.b16 %v292
    %v947 = vunpack.c.l.b16 %v293
    %v948 = vunpack.c.h.b16 %v293
    %v949 = vunpack.c.l.b16 %v294
    %v950 = vunpack.c.h.b16 %v294
    %v951 = vunpack.c.l.b16 %v295
    %v952 = vunpack.c.h.b16 %v295
    %v953 = vunpack.c.l.b16 %v296
    %v954 = vunpack.c.h.b16 %v296
    %v955 = vunpack.c.l.b16 %v297
    %v956 = vunpack.c.h.b16 %v297
    %v957 = vunpack.c.l.b16 %v298
    %v958 = vunpack.c.h.b16 %v298
    %v959 = vunpack.c.l.b16 %v299
    %v960 = vunpack.c.h.b16 %v299
    %v961 = vunpack.c.l.b16 %v300
    %v962 = vunpack.c.h.b16 %v300
    %v963 = vunpack.c.l.b16 %v301
    %v964 = vunpack.c.h.b16 %v301
    %v965 = vunpack.c.l.b16 %v302
    %v966 = vunpack.c.h.b16 %v302
    %v967 = vunpack.c.l.b16 %v303
    %v968 = vunpack.c.h.b16 %v303
    %v969 = vunpack.c.l.b16 %v304
    %v970 = vunpack.c.h.b16 %v304
    %v971 = vunpack.c.l.b16 %v305
    %v972 = vunpack.c.h.b16 %v305
    %v973 = vunpack.c.l.b16 %v306
    %v974 = vunpack.c.h.b16 %v306
    %v975 = vunpack.c.l.b16 %v307
    %v976 = vunpack.c.h.b16 %v307
    %v977 = vunpack.c.l.b16 %v308
    %v978 = vunpack.c.h.b16 %v308
    %v979 = vunpack.c.l.b16 %v309
    %v980 = vunpack.c.h.b16 %v309
    %v981 = vunpack.c.l.b16 %v310
    %v982 = vunpack.c.h.b16 %v310
    %v983 = vunpack.c.l.b16 %v311
    %v984 = vunpack.c.h.b16 %v311
    %v985 = vunpack.c.l.b16 %v312
    %v986 = vunpack.c.h.b16 %v312
    %v987 = vunpack.c.l.b16 %v313
    %v988 = vunpack.c.h.b16 %v313
    %v989 = vunpack.c.l.b16 %v314
    %v990 = vunpack.c.h.b16 %v314
    %v991 = vunpack.c.l.b16 %v315
    %v992 = vunpack.c.h.b16 %v315
    %v993 = vunpack.c.l.b16 %v316
    %v994 = vunpack.c.h.b16 %v316
    %v995 = vunpack.c.l.b16 %v317
    %v996 = vunpack.c.h.b16 %v317
    %v997 = vunpack.c.l.b16 %v318
    %v998 = vunpack.c.h.b16 %v318
    %v999 = vunpack.c.l.b16 %v319
    %v1000 = vunpack.c.h.b16 %v319
    %v1001 = vunpack.c.l.b16 %v320
    %v1002 = vunpack.c.h.b16 %v320
    %v1003 = vunpack.c.l.b16 %v321
    %v1004 = vunpack.c.h.b16 %v321
    %v1005 = vunpack.c.l.b16 %v322
    %v1006 = vunpack.c.h.b16 %v322
    %v1007 = vunpack.c.l.b16 %v323
    %v1008 = vunpack.c.h.b16 %v323
    %v1009 = vunpack.c.l.b16 %v324
    %v1010 = vunpack.c.h.b16 %v324
    %v1011 = vunpack.c.l.b16 %v325
    %v1012 = vunpack.c.h.b16 %v325
    %v1013 = vunpack.c.l.b16 %v326
    %v1014 = vunpack.c.h.b16 %v326
    %v1015 = vunpack.c.l.b16 %v327
    %v1016 = vunpack.c.h.b16 %v327
    %v1017 = vunpack.c.l.b16 %v328
    %v1018 = vunpack.c.h.b16 %v328
    %v1019 = vunpack.c.l.b16 %v329
    %v1020 = vunpack.c.h.b16 %v329
    %v1021 = vunpack.c.l.b16 %v330
    %v1022 = vunpack.c.h.b16 %v330
    %v1023 = vunpack.c.l.b16 %v331
    %v1024 = vunpack.c.h.b16 %v331
    %v1025 = vunpack.c.l.b16 %v332
    %v1026 = vunpack.c.h.b16 %v332
    %v1027 = vunpack.c.l.b16 %v333
    %v1028 = vunpack.c.h.b16 %v333
    %v1029 = vunpack.c.l.b16 %v334
    %v1030 = vunpack.c.h.b16 %v334
    %v1031 = vunpack.c.l.b16 %v335
    %v1032 = vunpack.c.h.b16 %v335
    %v1033 = vunpack.c.l.b16 %v336
    %v1034 = vunpack.c.h.b16 %v336
    %v1035 = vunpack.c.l.b16 %v337
    %v1036 = vunpack.c.h.b16 %v337
    %v1037 = vunpack.c.l.b16 %v338
    %v1038 = vunpack.c.h.b16 %v338
    %v1039 = vunpack.c.l.b16 %v339
    %v1040 = vunpack.c.h.b16 %v339
    %v1041 = vunpack.c.l.b16 %v340
    %v1042 = vunpack.c.h.b16 %v340
    %v1043 = vunpack.c.l.b16 %v341
    %v1044 = vunpack.c.h.b16 %v341
    %v1045 = vunpack.c.l.b16 %v342
    %v1046 = vunpack.c.h.b16 %v342
    %v1047 = vunpack.c.l.b16 %v343
    %v1048 = vunpack.c.h.b16 %v343
    %v1049 = vunpack.c.l.b16 %v344
    %v1050 = vunpack.c.h.b16 %v344
    %v1051 = vunpack.c.l.b16 %v345
    %v1052 = vunpack.c.h.b16 %v345
    %v1053 = vunpack.c.l.b16 %v346
    %v1054 = vunpack.c.h.b16 %v346
    %v1055 = vunpack.c.l.b16 %v347
    %v1056 = vunpack.c.h.b16 %v347
    %v1057 = vunpack.c.l.b16 %v348
    %v1058 = vunpack.c.h.b16 %v348
    %v1059 = vunpack.c.l.b16 %v349
    %v1060 = vunpack.c.h.b16 %v349
    %v1061 = vunpack.c.l.b16 %v350
    %v1062 = vunpack.c.h.b16 %v350
    %v1063 = vunpack.c.l.b16 %v351
    %v1064 = vunpack.c.h.b16 %v351
    %v1065 = vunpack.c.l.b16 %v352
    %v1066 = vunpack.c.h.b16 %v352
    %v1067 = vunpack.c.l.b16 %v353
    %v1068 = vunpack.c.h.b16 %v353
    %v1069 = vunpack.c.l.b16 %v354
    %v1070 = vunpack.c.h.b16 %v354
    %v1071 = vunpack.c.l.b16 %v355
    %v1072 = vunpack.c.h.b16 %v355
    %v1073 = vunpack.c.l.b16 %v356
    %v1074 = vunpack.c.h.b16 %v356
    %v1075 = vunpack.c.l.b16 %v357
    %v1076 = vunpack.c.h.b16 %v357
    %v1077 = vunpack.c.l.b16 %v358
    %v1078 = vunpack.c.h.b16 %v358
    %v1079 = vunpack.c.l.b16 %v359
    %v1080 = vunpack.c.h.b16 %v359
    %v1081 = vunpack.c.l.b16 %v360
    %v1082 = vunpack.c.h.b16 %v360
    %v1083 = vunpack.c.l.b16 %v361
    %v1084 = vunpack.c.h.b16 %v361
    %v1085 = vunpack.c.l.b16 %v362
    %v1086 = vunpack.c.h.b16 %v362
    %v1087 = vunpack.c.l.b16 %v363
    %v1088 = vunpack.c.h.b16 %v363
    %v1089 = vunpack.c.l.b16 %v364
    %v1090 = vunpack.c.h.b16 %v364
    %v1091 = vunpack.c.l.b16 %v365
    %v1092 = vunpack.c.h.b16 %v365
    %v1093 = vunpack.c.l.b16 %v366
    %v1094 = vunpack.c.h.b16 %v366
    %v1095 = vunpack.c.l.b16 %v367
    %v1096 = vunpack.c.h.b16 %v367
    %v1097 = vunpack.c.l.b16 %v368
    %v1098 = vunpack.c.h.b16 %v368
    %v1099 = vunpack.c.l.b16 %v369
    %v1100 = vunpack.c.h.b16 %v369
    %v1101 = vunpack.c.l.b16 %v370
    %v1102 = vunpack.c.h.b16 %v370
    %v1103 = vunpack.c.l.b16 %v371
    %v1104 = vunpack.c.h.b16 %v371
    %v1105 = vunpack.c.l.b16 %v372
    %v1106 = vunpack.c.h.b16 %v372
    %v1107 = vunpack.c.l.b16 %v373
    %v1108 = vunpack.c.h.b16 %v373
    %v1109 = vunpack.c.l.b16 %v374
    %v1110 = vunpack.c.h.b16 %v374
    %v1111 = vunpack.c.l.b16 %v375
    %v1112 = vunpack.c.h.b16 %v375
    %v1113 = vunpack.c.l.b16 %v376
    %v1114 = vunpack.c.h.b16 %v376
    %v1115 = vunpack.c.l.b16 %v377
    %v1116 = vunpack.c.h.b16 %v377
    %v1117 = vunpack.c.l.b16 %v378
    %v1118 = vunpack.c.h.b16 %v378
    %v1119 = vunpack.c.l.b16 %v379
    %v1120 = vunpack.c.h.b16 %v379
    %v1121 = vunpack.c.l.b16 %v380
    %v1122 = vunpack.c.h.b16 %v380
    %v1123 = vunpack.c.l.b16 %v381
    %v1124 = vunpack.c.h.b16 %v381
    %v1125 = vunpack.c.l.b16 %v382
    %v1126 = vunpack.c.h.b16 %v382
    %v1127 = vunpack.c.l.b16 %v383
    %v1128 = vunpack.c.h.b16 %v383
    %v1129 = vunpack.c.l.b16 %v384
    %v1130 = vunpack.c.h.b16 %v384
    %v1131 = vunpack.c.l.b16 %v385
    %v1132 = vunpack.c.h.b16 %v385
    %v1133 = vunpack.c.l.b16 %v386
    %v1134 = vunpack.c.h.b16 %v386
    %v1135 = vunpack.c.l.b16 %v387
    %v1136 = vunpack.c.h.b16 %v387
    %v1137 = vunpack.c.l.b16 %v388
    %v1138 = vunpack.c.h.b16 %v388
    %v1139 = vunpack.c.l.b16 %v389
    %v1140 = vunpack.c.h.b16 %v389
    %v1141 = vunpack.c.l.b16 %v390
    %v1142 = vunpack.c.h.b16 %v390
    %v1143 = vunpack.c.l.b16 %v391
    %v1144 = vunpack.c.h.b16 %v391
    %v1145 = vunpack.c.l.b16 %v392
    %v1146 = vunpack.c.h.b16 %v392
    %v1147 = vunpack.c.l.b16 %v393
    %v1148 = vunpack.c.h.b16 %v393
    %v1149 = vunpack.c.l.b16 %v394
    %v1150 = vunpack.c.h.b16 %v394
    %v1151 = vunpack.c.l.b16 %v395
    %v1152 = vunpack.c.h.b16 %v395
    %v1153 = vunpack.c.l.b16 %v396
    %v1154 = vunpack.c.h.b16 %v396
    %v1155 = vunpack.c.l.b16 %v397
    %v1156 = vunpack.c.h.b16 %v397
    %v1157 = vunpack.c.l.b16 %v398
    %v1158 = vunpack.c.h.b16 %v398
    %v1159 = vunpack.c.l.b16 %v399
    %v1160 = vunpack.c.h.b16 %v399
    %v1161 = vunpack.c.l.b16 %v400
    %v1162 = vunpack.c.h.b16 %v400
    %v1163 = vunpack.c.l.b16 %v401
    %v1164 = vunpack.c.h.b16 %v401
    %v1165 = vunpack.c.l.b16 %v402
    %v1166 = vunpack.c.h.b16 %v402
    %v1167 = vunpack.c.l.b16 %v403
    %v1168 = vunpack.c.h.b16 %v403
    %v1169 = vunpack.c.l.b16 %v404
    %v1170 = vunpack.c.h.b16 %v404
    %v1171 = vunpack.c.l.b16 %v405
    %v1172 = vunpack.c.h.b16 %v405
    %v1173 = vunpack.c.l.b16 %v406
    %v1174 = vunpack.c.h.b16 %v406
    %v1175 = vunpack.c.l.b16 %v407
    %v1176 = vunpack.c.h.b16 %v407
    %v1177 = vunpack.c.l.b16 %v408
    %v1178 = vunpack.c.h.b16 %v408
    %v1179 = vunpack.c.l.b16 %v409
    %v1180 = vunpack.c.h.b16 %v409
    %v1181 = vunpack.c.l.b16 %v410
    %v1182 = vunpack.c.h.b16 %v410
    %v1183 = vunpack.c.l.b16 %v411
    %v1184 = vunpack.c.h.b16 %v411
    %v1185 = vunpack.c.l.b16 %v412
    %v1186 = vunpack.c.h.b16 %v412
    %v1187 = vunpack.c.l.b16 %v413
    %v1188 = vunpack.c.h.b16 %v413
    %v1189 = vunpack.c.l.b16 %v414
    %v1190 = vunpack.c.h.b16 %v414
    %v1191 = vunpack.c.l.b16 %v415
    %v1192 = vunpack.c.h.b16 %v415
    %v1193 = vunpack.c.l.b16 %v416
    %v1194 = vunpack.c.h.b16 %v416
    %v1195 = vunpack.c.l.b16 %v417
    %v1196 = vunpack.c.h.b16 %v417
    %v1197 = vunpack.c.l.b16 %v418
    %v1198 = vunpack.c.h.b16 %v418
    %v1199 = vunpack.c.l.b16 %v419
    %v1200 = vunpack.c.h.b16 %v419
    %v1201 = vunpack.c.l.b16 %v420
    %v1202 = vunpack.c.h.b16 %v420
    %v1203 = vunpack.c.l.b16 %v421
    %v1204 = vunpack.c.h.b16 %v421
    %v1205 = vunpack.c.l.b16 %v422
    %v1206 = vunpack.c.h.b16 %v422
    %v1207 = vunpack.c.l.b16 %v423
    %v1208 = vunpack.c.h.b16 %v423
    %v1209 = vunpack.c.l.b16 %v424
    %v1210 = vunpack.c.h.b16 %v424
    %v1211 = vunpack.c.l.b16 %v425
    %v1212 = vunpack.c.h.b16 %v425
    %v1213 = vunpack.c.l.b16 %v426
    %v1214 = vunpack.c.h.b16 %v426
    %v1215 = vunpack.c.l.b16 %v427
    %v1216 = vunpack.c.h.b16 %v427
    %v1217 = vunpack.c.l.b16 %v428
    %v1218 = vunpack.c.h.b16 %v428
    %v1219 = vpack.c.b16 %v711, %v707
    %v1220 = vpack.c.b16 %v712, %v708
    %v1221 = vpack.c.b16 %v713, %v709
    %v1222 = vpack.c.b16 %v714, %v710
    %v1223 = vpack.c.b16 %v719, %v715
    %v1224 = vpack.c.b16 %v720, %v716
    %v1225 = vpack.c.b16 %v721, %v717
    %v1226 = vpack.c.b16 %v722, %v718
    %v1227 = vpack.c.b16 %v727, %v723
    %v1228 = vpack.c.b16 %v728, %v724
    %v1229 = vpack.c.b16 %v729, %v725
    %v1230 = vpack.c.b16 %v730, %v726
    %v1231 = vpack.c.b16 %v735, %v731
    %v1232 = vpack.c.b16 %v736, %v732
    %v1233 = vpack.c.b16 %v737, %v733
    %v1234 = vpack.c.b16 %v738, %v734
    %v1235 = vpack.c.b16 %v743, %v739
    %v1236 = vpack.c.b16 %v744, %v740
    %v1237 = vpack.c.b16 %v745, %v741
    %v1238 = vpack.c.b16 %v746, %v742
    %v1239 = vpack.c.b16 %v751, %v747
    %v1240 = vpack.c.b16 %v752, %v748
    %v1241 = vpack.c.b16 %v753, %v749
    %v1242 = vpack.c.b16 %v754, %v750
    %v1243 = vpack.c.b16 %v759, %v755
    %v1244 = vpack.c.b16 %v760, %v756
    %v1245 = vpack.c.b16 %v761, %v757
    %v1246 = vpack.c.b16 %v762, %v758
    %v1247 = vpack.c.b16 %v767, %v763
    %v1248 = vpack.c.b16 %v768, %v764
    %v1249 = vpack.c.b16 %v769, %v765
    %v1250 = vpack.c.b16 %v770, %v766
    %v1251 = vpack.c.b16 %v775, %v771
    %v1252 = vpack.c.b16 %v776, %v772
    %v1253 = vpack.c.b16 %v777, %v773
    %v1254 = vpack.c.b16 %v778, %v774
    %v1255 = vpack.c.b16 %v783, %v779
    %v1256 = vpack.c.b16 %v784, %v780
    %v1257 = vpack.c.b16 %v785, %v781
    %v1258 = vpack.c.b16 %v786, %v782
    %v1259 = vpack.c.b16 %v791, %v787
    %v1260 = vpack.c.b16 %v792, %v788
    %v1261 = vpack.c.b16 %v793, %v789
    %v1262 = vpack.c.b16 %v794, %v790
    %v1263 = vpack.c.b16 %v799, %v795
    %v1264 = vpack.c.b16 %v800, %v796
    %v1265 = vpack.c.b16 %v801, %v797
    %v1266 = vpack.c.b16 %v802, %v798
    %v1267 = vpack.c.b16 %v807, %v803
    %v1268 = vpack.c.b16 %v808, %v804
    %v1269 = vpack.c.b16 %v809, %v805
    %v1270 = vpack.c.b16 %v810, %v806
    %v1271 = vpack.c.b16 %v815, %v811
    %v1272 = vpack.c.b16 %v816, %v812
    %v1273 = vpack.c.b16 %v817, %v813
    %v1274 = vpack.c.b16 %v818, %v814
    %v1275 = vpack.c.b16 %v823, %v819
    %v1276 = vpack.c.b16 %v824, %v820
    %v1277 = vpack.c.b16 %v825, %v821
    %v1278 = vpack.c.b16 %v826, %v822
    %v1279 = vpack.c.b16 %v831, %v827
    %v1280 = vpack.c.b16 %v832, %v828
    %v1281 = vpack.c.b16 %v833, %v829
    %v1282 = vpack.c.b16 %v834, %v830
    %v1283 = vpack.c.b16 %v839, %v835
    %v1284 = vpack.c.b16 %v840, %v836
    %v1285 = vpack.c.b16 %v841, %v837
    %v1286 = vpack.c.b16 %v842, %v838
    %v1287 = vpack.c.b16 %v847, %v843
    %v1288 = vpack.c.b16 %v848, %v844
    %v1289 = vpack.c.b16 %v849, %v845
    %v1290 = vpack.c.b16 %v850, %v846
    %v1291 = vpack.c.b16 %v855, %v851
    %v1292 = vpack.c.b16 %v856, %v852
    %v1293 = vpack.c.b16 %v857, %v853
    %v1294 = vpack.c.b16 %v858, %v854
    %v1295 = vpack.c.b16 %v863, %v859
    %v1296 = vpack.c.b16 %v864, %v860
    %v1297 = vpack.c.b16 %v865, %v861
    %v1298 = vpack.c.b16 %v866, %v862
    %v1299 = vpack.c.b16 %v871, %v867
    %v1300 = vpack.c.b16 %v872, %v868
    %v1301 = vpack.c.b16 %v873, %v869
    %v1302 = vpack.c.b16 %v874, %v870
    %v1303 = vpack.c.b16 %v879, %v875
    %v1304 = vpack.c.b16 %v880, %v876
    %v1305 = vpack.c.b16 %v881, %v877
    %v1306 = vpack.c.b16 %v882, %v878
    %v1307 = vpack.c.b16 %v887, %v883
    %v1308 = vpack.c.b16 %v888, %v884
    %v1309 = vpack.c.b16 %v889, %v885
    %v1310 = vpack.c.b16 %v890, %v886
    %v1311 = vpack.c.b16 %v895, %v891
    %v1312 = vpack.c.b16 %v896, %v892
    %v1313 = vpack.c.b16 %v897, %v893
    %v1314 = vpack.c.b16 %v898, %v894
    %v1315 = vpack.c.b16 %v903, %v899
    %v1316 = vpack.c.b16 %v904, %v900
    %v1317 = vpack.c.b16 %v905, %v901
    %v1318 = vpack.c.b16 %v906, %v902
    %v1319 = vpack.c.b16 %v911, %v907
    %v1320 = vpack.c.b16 %v912, %v908
    %v1321 = vpack.c.b16 %v913, %v909
    %v1322 = vpack.c.b16 %v914, %v910
    %v1323 = vpack.c.b16 %v919, %v915
    %v1324 = vpack.c.b16 %v920, %v916
    %v1325 = vpack.c.b16 %v921, %v917
    %v1326 = vpack.c.b16 %v922, %v918
    %v1327 = vpack.c.b16 %v927, %v923
    %v1328 = vpack.c.b16 %v928, %v924
    %v1329 = vpack.c.b16 %v929, %v925
    %v1330 = vpack.c.b16 %v930, %v926
    %v1331 = vpack.c.b16 %v935, %v931
    %v1332 = vpack.c.b16 %v936, %v932
    %v1333 = vpack.c.b16 %v937, %v933
    %v1334 = vpack.c.b16 %v938, %v934
    %v1335 = vpack.c.b16 %v943, %v939
    %v1336 = vpack.c.b16 %v944, %v940
    %v1337 = vpack.c.b16 %v945, %v941
    %v1338 = vpack.c.b16 %v946, %v942
    %v1339 = vpack.c.b16 %v951, %v947
    %v1340 = vpack.c.b16 %v952, %v948
    %v1341 = vpack.c.b16 %v953, %v949
    %v1342 = vpack.c.b16 %v954, %v950
    %v1343 = vpack.c.b16 %v959, %v955
    %v1344 = vpack.c.b16 %v960, %v956
    %v1345 = vpack.c.b16 %v961, %v957
    %v1346 = vpack.c.b16 %v962, %v958
    %v1347 = vpack.c.b16 %v967, %v963
    %v1348 = vpack.c.b16 %v968, %v964
    %v1349 = vpack.c.b16 %v969, %v965
    %v1350 = vpack.c.b16 %v970, %v966
    %v1351 = vpack.c.b16 %v975, %v971
    %v1352 = vpack.c.b16 %v976, %v972
    %v1353 = vpack.c.b16 %v977, %v973
    %v1354 = vpack.c.b16 %v978, %v974
    %v1355 = vpack.c.b16 %v983, %v979
    %v1356 = vpack.c.b16 %v984, %v980
    %v1357 = vpack.c.b16 %v985, %v981
    %v1358 = vpack.c.b16 %v986, %v982
    %v1359 = vpack.c.b16 %v991, %v987
    %v1360 = vpack.c.b16 %v992, %v988
    %v1361 = vpack.c.b16 %v993, %v989
    %v1362 = vpack.c.b16 %v994, %v990
    %v1363 = vpack.c.b16 %v999, %v995
    %v1364 = vpack.c.b16 %v1000, %v996
    %v1365 = vpack.c.b16 %v1001, %v997
    %v1366 = vpack.c.b16 %v1002, %v998
    %v1367 = vpack.c.b16 %v1007, %v1003
    %v1368 = vpack.c.b16 %v1008, %v1004
    %v1369 = vpack.c.b16 %v1009, %v1005
    %v1370 = vpack.c.b16 %v1010, %v1006
    %v1371 = vpack.c.b16 %v1015, %v1011
    %v1372 = vpack.c.b16 %v1016, %v1012
    %v1373 = vpack.c.b16 %v1017, %v1013
    %v1374 = vpack.c.b16 %v1018, %v1014
    %v1375 = vpack.c.b16 %v1023, %v1019
    %v1376 = vpack.c.b16 %v1024, %v1020
    %v1377 = vpack.c.b16 %v1025, %v1021
    %v1378 = vpack.c.b16 %v1026, %v1022
    %v1379 = vpack.c.b16 %v1031, %v1027
    %v1380 = vpack.c.b16 %v1032, %v1028
    %v1381 = vpack.c.b16 %v1033, %v1029
    %v1382 = vpack.c.b16 %v1034, %v1030
    %v1383 = vpack.c.b16 %v1039, %v1035
    %v1384 = vpack.c.b16 %v1040, %v1036
    %v1385 = vpack.c.b16 %v1041, %v1037
    %v1386 = vpack.c.b16 %v1042, %v1038
    %v1387 = vpack.c.b16 %v1047, %v1043
    %v1388 = vpack.c.b16 %v1048, %v1044
    %v1389 = vpack.c.b16 %v1049, %v1045
    %v1390 = vpack.c.b16 %v1050, %v1046
    %v1391 = vpack.c.b16 %v1055, %v1051
    %v1392 = vpack.c.b16 %v1056, %v1052
    %v1393 = vpack.c.b16 %v1057, %v1053
    %v1394 = vpack.c.b16 %v1058, %v1054
    %v1395 = vpack.c.b16 %v1063, %v1059
    %v1396 = vpack.c.b16 %v1064, %v1060
    %v1397 = vpack.c.b16 %v1065, %v1061
    %v1398 = vpack.c.b16 %v1066, %v1062
    %v1399 = vpack.c.b16 %v1071, %v1067
    %v1400 = vpack.c.b16 %v1072, %v1068
    %v1401 = vpack.c.b16 %v1073, %v1069
    %v1402 = vpack.c.b16 %v1074, %v1070
    %v1403 = vpack.c.b16 %v1079, %v1075
    %v1404 = vpack.c.b16 %v1080, %v1076
    %v1405 = vpack.c.b16 %v1081, %v1077
    %v1406 = vpack.c.b16 %v1082, %v1078
    %v1407 = vpack.c.b16 %v1087, %v1083
    %v1408 = vpack.c.b16 %v1088, %v1084
    %v1409 = vpack.c.b16 %v1089, %v1085
    %v1410 = vpack.c.b16 %v1090, %v1086
    %v1411 = vpack.c.b16 %v1095, %v1091
    %v1412 = vpack.c.b16 %v1096, %v1092
    %v1413 = vpack.c.b16 %v1097, %v1093
    %v1414 = vpack.c.b16 %v1098, %v1094
    %v1415 = vpack.c.b16 %v1103, %v1099
    %v1416 = vpack.c.b16 %v1104, %v1100
    %v1417 = vpack.c.b16 %v1105, %v1101
    %v1418 = vpack.c.b16 %v1106, %v1102
    %v1419 = vpack.c.b16 %v1111, %v1107
    %v1420 = vpack.c.b16 %v1112, %v1108
    %v1421 = vpack.c.b16 %v1113, %v1109
    %v1422 = vpack.c.b16 %v1114, %v1110
    %v1423 = vpack.c.b16 %v1119, %v1115
    %v1424 = vpack.c.b16 %v1120, %v1116
    %v1425 = vpack.c.b16 %v1121, %v1117
    %v1426 = vpack.c.b16 %v1122, %v1118
    %v1427 = vpack.c.b16 %v1127, %v1123
    %v1428 = vpack.c.b16 %v1128, %v1124
    %v1429 = vpack.c.b16 %v1129, %v1125
    %v1430 = vpack.c.b16 %v1130, %v1126
    %v1431 = vpack.c.b16 %v1135, %v1131
    %v1432 = vpack.c.b16 %v1136, %v1132
    %v1433 = vpack.c.b16 %v1137, %v1133
    %v1434 = vpack.c.b16 %v1138, %v1134
    %v1435 = vpack.c.b16 %v1143, %v1139
    %v1436 = vpack.c.b16 %v1144, %v1140
    %v1437 = vpack.c.b16 %v1145, %v1141
    %v1438 = vpack.c.b16 %v1146, %v1142
    %v1439 = vpack.c.b16 %v1151, %v1147
    %v1440 = vpack.c.b16 %v1152, %v1148
    %v1441 = vpack.c.b16 %v1153, %v1149
    %v1442 = vpack.c.b16 %v1154, %v1150
    %v1443 = vpack.c.b16 %v1159, %v1155
    %v1444 = vpack.c.b16 %v1160, %v1156
    %v1445 = vpack.c.b16 %v1161, %v1157
    %v1446 = vpack.c.b16 %v1162, %v1158
    %v1447 = vpack.c.b16 %v1167, %v1163
    %v1448 = vpack.c.b16 %v1168, %v1164
    %v1449 = vpack.c.b16 %v1169, %v1165
    %v1450 = vpack.c.b16 %v1170, %v1166
    %v1451 = vpack.c.b16 %v1175, %v1171
    %v1452 = vpack.c.b16 %v1176, %v1172
    %v1453 = vpack.c.b16 %v1177, %v1173
    %v1454 = vpack.c.b16 %v1178, %v1174
    %v1455 = vpack.c.b16 %v1183, %v1179
    %v1456 = vpack.c.b16 %v1184, %v1180
    %v1457 = vpack.c.b16 %v1185, %v1181
    %v1458 = vpack.c.b16 %v1186, %v1182
    %v1459 = vpack.c.b16 %v1191, %v1187
    %v1460 = vpack.c.b16 %v1192, %v1188
    %v1461 = vpack.c.b16 %v1193, %v1189
    %v1462 = vpack.c.b16 %v1194, %v1190
    %v1463 = vpack.c.b16 %v1199, %v1195
    %v1464 = vpack.c.b16 %v1200, %v1196
    %v1465 = vpack.c.b16 %v1201, %v1197
    %v1466 = vpack.c.b16 %v1202, %v1198
    %v1467 = vpack.c.b16 %v1207, %v1203
    %v1468 = vpack.c.b16 %v1208, %v1204
    %v1469 = vpack.c.b16 %v1209, %v1205
    %v1470 = vpack.c.b16 %v1210, %v1206
    %v1471 = vpack.c.b16 %v1215, %v1211
    %v1472 = vpack.c.b16 %v1216, %v1212
    %v1473 = vpack.c.b16 %v1217, %v1213
    %v1474 = vpack.c.b16 %v1218, %v1214
    %1731 = vmatprep.subr.bf16.mxu0 %v1220
    %1732 = vmatpush1.bf16.msra.mxu0 %v1219
    %1733 = vmatprep.subr.bf16.mxu0 %v1224
    %1734 = vmatpush1.bf16.msra.mxu0 %v1223
    %1735 = vmatprep.subr.bf16.mxu0 %v1228
    %1736 = vmatpush1.bf16.msra.mxu0 %v1227
    %1737 = vmatprep.subr.bf16.mxu0 %v1232
    %1738 = vmatpush1.bf16.msra.mxu0 %v1231
    %1739 = vmatprep.subr.bf16.mxu0 %v1236
    %1740 = vmatpush1.bf16.msra.mxu0 %v1235
    %1741 = vmatprep.subr.bf16.mxu0 %v1240
    %1742 = vmatpush1.bf16.msra.mxu0 %v1239
    %1743 = vmatprep.subr.bf16.mxu0 %v1244
    %1744 = vmatpush1.bf16.msra.mxu0 %v1243
    %1745 = vmatprep.subr.bf16.mxu0 %v1248
    %1746 = vmatpush1.bf16.msra.mxu0 %v1247
    %1747 = vmatprep.subr.bf16.mxu0 %v1252
    %1748 = vmatpush1.bf16.msra.mxu0 %v1251
    %1749 = vmatprep.subr.bf16.mxu0 %v1256
    %1750 = vmatpush1.bf16.msra.mxu0 %v1255
    %1751 = vmatprep.subr.bf16.mxu0 %v1260
    %1752 = vmatpush1.bf16.msra.mxu0 %v1259
    %1753 = vmatprep.subr.bf16.mxu0 %v1264
    %1754 = vmatpush1.bf16.msra.mxu0 %v1263
    %1755 = vmatprep.subr.bf16.mxu0 %v1268
    %1756 = vmatpush1.bf16.msra.mxu0 %v1267
    %1757 = vmatprep.subr.bf16.mxu0 %v1272
    %1758 = vmatpush1.bf16.msra.mxu0 %v1271
    %1759 = vmatprep.subr.bf16.mxu0 %v1276
    %1760 = vmatpush1.bf16.msra.mxu0 %v1275
    %1761 = vmatprep.subr.bf16.mxu0 %v1280
    %1762 = vmatpush1.bf16.msra.mxu0 %v1279
    %1763 = vmatprep.mubr.bf16.mxu0 %v166
    %1764 = vmatmul.mubr.bf16.gmra.mrb[0].mxu0 %v165
    %v1765 = vpop.f32.mrb[0].mxu0
    %v1766 = vadd.f32 %v434, %v1765
    %v1767 = vpop.f32.mrb[0].mxu0
    %v1768 = vadd.f32 %v438, %v1767
    %v1769 = vpop.f32.mrb[0].mxu0
    %v1770 = vpop.f32.mrb[0].mxu0
    %1771 = vdwg.mxu0
    %1772 = vmatprep.subr.bf16.mxu0 %v1284
    %1773 = vmatpush1.bf16.msra.mxu0 %v1283
    %1774 = vmatprep.subr.bf16.mxu0 %v1288
    %1775 = vmatpush1.bf16.msra.mxu0 %v1287
    %1776 = vmatprep.subr.bf16.mxu0 %v1292
    %1777 = vmatpush1.bf16.msra.mxu0 %v1291
    %1778 = vmatprep.subr.bf16.mxu0 %v1296
    %1779 = vmatpush1.bf16.msra.mxu0 %v1295
    %1780 = vmatprep.subr.bf16.mxu0 %v1300
    %1781 = vmatpush1.bf16.msra.mxu0 %v1299
    %1782 = vmatprep.subr.bf16.mxu0 %v1304
    %1783 = vmatpush1.bf16.msra.mxu0 %v1303
    %1784 = vmatprep.subr.bf16.mxu0 %v1308
    %1785 = vmatpush1.bf16.msra.mxu0 %v1307
    %1786 = vmatprep.subr.bf16.mxu0 %v1312
    %1787 = vmatpush1.bf16.msra.mxu0 %v1311
    %1788 = vmatprep.subr.bf16.mxu0 %v1316
    %1789 = vmatpush1.bf16.msra.mxu0 %v1315
    %1790 = vmatprep.subr.bf16.mxu0 %v1320
    %1791 = vmatpush1.bf16.msra.mxu0 %v1319
    %1792 = vmatprep.subr.bf16.mxu0 %v1324
    %1793 = vmatpush1.bf16.msra.mxu0 %v1323
    %1794 = vmatprep.subr.bf16.mxu0 %v1328
    %1795 = vmatpush1.bf16.msra.mxu0 %v1327
    %1796 = vmatprep.subr.bf16.mxu0 %v1332
    %1797 = vmatpush1.bf16.msra.mxu0 %v1331
    %1798 = vmatprep.subr.bf16.mxu0 %v1336
    %1799 = vmatpush1.bf16.msra.mxu0 %v1335
    %1800 = vmatprep.subr.bf16.mxu0 %v1340
    %1801 = vmatpush1.bf16.msra.mxu0 %v1339
    %1802 = vmatprep.subr.bf16.mxu0 %v1344
    %1803 = vmatpush1.bf16.msra.mxu0 %v1343
    %1804 = vmatprep.mubr.bf16.mxu0 %v168
    %1805 = vmatmul.mubr.bf16.gmra.mrb[0].mxu0 %v167
    %v1806 = vpop.f32.mrb[0].mxu0
    %v1807 = vadd.f32 %v1766, %v1806
    %v1808 = vpop.f32.mrb[0].mxu0
    %v1809 = vadd.f32 %v1768, %v1808
    %v1810 = vpop.f32.mrb[0].mxu0
    %v1811 = vpop.f32.mrb[0].mxu0
    %1812 = vdwg.mxu0
    %1813 = vmatprep.subr.bf16.mxu0 %v1348
    %1814 = vmatpush1.bf16.msra.mxu0 %v1347
    %1815 = vmatprep.subr.bf16.mxu0 %v1352
    %1816 = vmatpush1.bf16.msra.mxu0 %v1351
    %1817 = vmatprep.subr.bf16.mxu0 %v1356
    %1818 = vmatpush1.bf16.msra.mxu0 %v1355
    %1819 = vmatprep.subr.bf16.mxu0 %v1360
    %1820 = vmatpush1.bf16.msra.mxu0 %v1359
    %1821 = vmatprep.subr.bf16.mxu0 %v1364
    %1822 = vmatpush1.bf16.msra.mxu0 %v1363
    %1823 = vmatprep.subr.bf16.mxu0 %v1368
    %1824 = vmatpush1.bf16.msra.mxu0 %v1367
    %1825 = vmatprep.subr.bf16.mxu0 %v1372
    %1826 = vmatpush1.bf16.msra.mxu0 %v1371
    %1827 = vmatprep.subr.bf16.mxu0 %v1376
    %1828 = vmatpush1.bf16.msra.mxu0 %v1375
    %1829 = vmatprep.subr.bf16.mxu0 %v1380
    %1830 = vmatpush1.bf16.msra.mxu0 %v1379
    %1831 = vmatprep.subr.bf16.mxu0 %v1384
    %1832 = vmatpush1.bf16.msra.mxu0 %v1383
    %1833 = vmatprep.subr.bf16.mxu0 %v1388
    %1834 = vmatpush1.bf16.msra.mxu0 %v1387
    %1835 = vmatprep.subr.bf16.mxu0 %v1392
    %1836 = vmatpush1.bf16.msra.mxu0 %v1391
    %1837 = vmatprep.subr.bf16.mxu0 %v1396
    %1838 = vmatpush1.bf16.msra.mxu0 %v1395
    %1839 = vmatprep.subr.bf16.mxu0 %v1400
    %1840 = vmatpush1.bf16.msra.mxu0 %v1399
    %1841 = vmatprep.subr.bf16.mxu0 %v1404
    %1842 = vmatpush1.bf16.msra.mxu0 %v1403
    %1843 = vmatprep.subr.bf16.mxu0 %v1408
    %1844 = vmatpush1.bf16.msra.mxu0 %v1407
    %1845 = vmatprep.mubr.bf16.mxu0 %v170
    %1846 = vmatmul.mubr.bf16.gmra.mrb[0].mxu0 %v169
    %v1847 = vpop.f32.mrb[0].mxu0
    %v1848 = vadd.f32 %v1807, %v1847
    %v1849 = vpop.f32.mrb[0].mxu0
    %v1850 = vadd.f32 %v1809, %v1849
    %v1851 = vpop.f32.mrb[0].mxu0
    %v1852 = vpop.f32.mrb[0].mxu0
    %1853 = vdwg.mxu0
    %1854 = vmatprep.subr.bf16.mxu0 %v1412
    %1855 = vmatpush1.bf16.msra.mxu0 %v1411
    %1856 = vmatprep.subr.bf16.mxu0 %v1416
    %1857 = vmatpush1.bf16.msra.mxu0 %v1415
    %1858 = vmatprep.subr.bf16.mxu0 %v1420
    %1859 = vmatpush1.bf16.msra.mxu0 %v1419
    %1860 = vmatprep.subr.bf16.mxu0 %v1424
    %1861 = vmatpush1.bf16.msra.mxu0 %v1423
    %1862 = vmatprep.subr.bf16.mxu0 %v1428
    %1863 = vmatpush1.bf16.msra.mxu0 %v1427
    %1864 = vmatprep.subr.bf16.mxu0 %v1432
    %1865 = vmatpush1.bf16.msra.mxu0 %v1431
    %1866 = vmatprep.subr.bf16.mxu0 %v1436
    %1867 = vmatpush1.bf16.msra.mxu0 %v1435
    %1868 = vmatprep.subr.bf16.mxu0 %v1440
    %1869 = vmatpush1.bf16.msra.mxu0 %v1439
    %1870 = vmatprep.subr.bf16.mxu0 %v1444
    %1871 = vmatpush1.bf16.msra.mxu0 %v1443
    %1872 = vmatprep.subr.bf16.mxu0 %v1448
    %1873 = vmatpush1.bf16.msra.mxu0 %v1447
    %1874 = vmatprep.subr.bf16.mxu0 %v1452
    %1875 = vmatpush1.bf16.msra.mxu0 %v1451
    %1876 = vmatprep.subr.bf16.mxu0 %v1456
    %1877 = vmatpush1.bf16.msra.mxu0 %v1455
    %1878 = vmatprep.subr.bf16.mxu0 %v1460
    %1879 = vmatpush1.bf16.msra.mxu0 %v1459
    %1880 = vmatprep.subr.bf16.mxu0 %v1464
    %1881 = vmatpush1.bf16.msra.mxu0 %v1463
    %1882 = vmatprep.subr.bf16.mxu0 %v1468
    %1883 = vmatpush1.bf16.msra.mxu0 %v1467
    %1884 = vmatprep.subr.bf16.mxu0 %v1472
    %1885 = vmatpush1.bf16.msra.mxu0 %v1471
    %1886 = vmatprep.mubr.bf16.mxu0 %v172
    %1887 = vmatmul.mubr.bf16.gmra.mrb[0].mxu0 %v171
    %v1888 = vpop.f32.mrb[0].mxu0
    %v1889 = vadd.f32 %v1848, %v1888
    %v1890 = vpop.f32.mrb[0].mxu0
    %v1891 = vadd.f32 %v1850, %v1890
    %v1892 = vpop.f32.mrb[0].mxu0
    %v1893 = vpop.f32.mrb[0].mxu0
    %1894 = vdwg.mxu0
    %1895 = vmatprep.subr.bf16.mxu0 %v1222
    %1896 = vmatpush1.bf16.msra.mxu0 %v1221
    %1897 = vmatprep.subr.bf16.mxu0 %v1226
    %1898 = vmatpush1.bf16.msra.mxu0 %v1225
    %1899 = vmatprep.subr.bf16.mxu0 %v1230
    %1900 = vmatpush1.bf16.msra.mxu0 %v1229
    %1901 = vmatprep.subr.bf16.mxu0 %v1234
    %1902 = vmatpush1.bf16.msra.mxu0 %v1233
    %1903 = vmatprep.subr.bf16.mxu0 %v1238
    %1904 = vmatpush1.bf16.msra.mxu0 %v1237
    %1905 = vmatprep.subr.bf16.mxu0 %v1242
    %1906 = vmatpush1.bf16.msra.mxu0 %v1241
    %1907 = vmatprep.subr.bf16.mxu0 %v1246
    %1908 = vmatpush1.bf16.msra.mxu0 %v1245
    %1909 = vmatprep.subr.bf16.mxu0 %v1250
    %1910 = vmatpush1.bf16.msra.mxu0 %v1249
    %1911 = vmatprep.subr.bf16.mxu0 %v1254
    %1912 = vmatpush1.bf16.msra.mxu0 %v1253
    %1913 = vmatprep.subr.bf16.mxu0 %v1258
    %1914 = vmatpush1.bf16.msra.mxu0 %v1257
    %1915 = vmatprep.subr.bf16.mxu0 %v1262
    %1916 = vmatpush1.bf16.msra.mxu0 %v1261
    %1917 = vmatprep.subr.bf16.mxu0 %v1266
    %1918 = vmatpush1.bf16.msra.mxu0 %v1265
    %1919 = vmatprep.subr.bf16.mxu0 %v1270
    %1920 = vmatpush1.bf16.msra.mxu0 %v1269
    %1921 = vmatprep.subr.bf16.mxu0 %v1274
    %1922 = vmatpush1.bf16.msra.mxu0 %v1273
    %1923 = vmatprep.subr.bf16.mxu0 %v1278
    %1924 = vmatpush1.bf16.msra.mxu0 %v1277
    %1925 = vmatprep.subr.bf16.mxu0 %v1282
    %1926 = vmatpush1.bf16.msra.mxu0 %v1281
    %1927 = vmatprep.mubr.bf16.mxu0 %v166
    %1928 = vmatmul.mubr.bf16.gmra.mrb[0].mxu0 %v165
    %v1929 = vpop.f32.mrb[0].mxu0
    %v1930 = vadd.f32 %v442, %v1929
    %v1931 = vpop.f32.mrb[0].mxu0
    %v1932 = vadd.f32 %v446, %v1931
    %v1933 = vpop.f32.mrb[0].mxu0
    %v1934 = vpop.f32.mrb[0].mxu0
    %1935 = vdwg.mxu0
    %1936 = vmatprep.subr.bf16.mxu0 %v1286
    %1937 = vmatpush1.bf16.msra.mxu0 %v1285
    %1938 = vmatprep.subr.bf16.mxu0 %v1290
    %1939 = vmatpush1.bf16.msra.mxu0 %v1289
    %1940 = vmatprep.subr.bf16.mxu0 %v1294
    %1941 = vmatpush1.bf16.msra.mxu0 %v1293
    %1942 = vmatprep.subr.bf16.mxu0 %v1298
    %1943 = vmatpush1.bf16.msra.mxu0 %v1297
    %1944 = vmatprep.subr.bf16.mxu0 %v1302
    %1945 = vmatpush1.bf16.msra.mxu0 %v1301
    %1946 = vmatprep.subr.bf16.mxu0 %v1306
    %1947 = vmatpush1.bf16.msra.mxu0 %v1305
    %1948 = vmatprep.subr.bf16.mxu0 %v1310
    %1949 = vmatpush1.bf16.msra.mxu0 %v1309
    %1950 = vmatprep.subr.bf16.mxu0 %v1314
    %1951 = vmatpush1.bf16.msra.mxu0 %v1313
    %1952 = vmatprep.subr.bf16.mxu0 %v1318
    %1953 = vmatpush1.bf16.msra.mxu0 %v1317
    %1954 = vmatprep.subr.bf16.mxu0 %v1322
    %1955 = vmatpush1.bf16.msra.mxu0 %v1321
    %1956 = vmatprep.subr.bf16.mxu0 %v1326
    %1957 = vmatpush1.bf16.msra.mxu0 %v1325
    %1958 = vmatprep.subr.bf16.mxu0 %v1330
    %1959 = vmatpush1.bf16.msra.mxu0 %v1329
    %1960 = vmatprep.subr.bf16.mxu0 %v1334
    %1961 = vmatpush1.bf16.msra.mxu0 %v1333
    %1962 = vmatprep.subr.bf16.mxu0 %v1338
    %1963 = vmatpush1.bf16.msra.mxu0 %v1337
    %1964 = vmatprep.subr.bf16.mxu0 %v1342
    %1965 = vmatpush1.bf16.msra.mxu0 %v1341
    %1966 = vmatprep.subr.bf16.mxu0 %v1346
    %1967 = vmatpush1.bf16.msra.mxu0 %v1345
    %1968 = vmatprep.mubr.bf16.mxu0 %v168
    %1969 = vmatmul.mubr.bf16.gmra.mrb[0].mxu0 %v167
    %v1970 = vpop.f32.mrb[0].mxu0
    %v1971 = vadd.f32 %v1930, %v1970
    %v1972 = vpop.f32.mrb[0].mxu0
    %v1973 = vadd.f32 %v1932, %v1972
    %v1974 = vpop.f32.mrb[0].mxu0
    %v1975 = vpop.f32.mrb[0].mxu0
    %1976 = vdwg.mxu0
    %1977 = vmatprep.subr.bf16.mxu0 %v1350
    %1978 = vmatpush1.bf16.msra.mxu0 %v1349
    %1979 = vmatprep.subr.bf16.mxu0 %v1354
    %1980 = vmatpush1.bf16.msra.mxu0 %v1353
    %1981 = vmatprep.subr.bf16.mxu0 %v1358
    %1982 = vmatpush1.bf16.msra.mxu0 %v1357
    %1983 = vmatprep.subr.bf16.mxu0 %v1362
    %1984 = vmatpush1.bf16.msra.mxu0 %v1361
    %1985 = vmatprep.subr.bf16.mxu0 %v1366
    %1986 = vmatpush1.bf16.msra.mxu0 %v1365
    %1987 = vmatprep.subr.bf16.mxu0 %v1370
    %1988 = vmatpush1.bf16.msra.mxu0 %v1369
    %1989 = vmatprep.subr.bf16.mxu0 %v1374
    %1990 = vmatpush1.bf16.msra.mxu0 %v1373
    %1991 = vmatprep.subr.bf16.mxu0 %v1378
    %1992 = vmatpush1.bf16.msra.mxu0 %v1377
    %1993 = vmatprep.subr.bf16.mxu0 %v1382
    %1994 = vmatpush1.bf16.msra.mxu0 %v1381
    %1995 = vmatprep.subr.bf16.mxu0 %v1386
    %1996 = vmatpush1.bf16.msra.mxu0 %v1385
    %1997 = vmatprep.subr.bf16.mxu0 %v1390
    %1998 = vmatpush1.bf16.msra.mxu0 %v1389
    %1999 = vmatprep.subr.bf16.mxu0 %v1394
    %2000 = vmatpush1.bf16.msra.mxu0 %v1393
    %2001 = vmatprep.subr.bf16.mxu0 %v1398
    %2002 = vmatpush1.bf16.msra.mxu0 %v1397
    %2003 = vmatprep.subr.bf16.mxu0 %v1402
    %2004 = vmatpush1.bf16.msra.mxu0 %v1401
    %2005 = vmatprep.subr.bf16.mxu0 %v1406
    %2006 = vmatpush1.bf16.msra.mxu0 %v1405
    %2007 = vmatprep.subr.bf16.mxu0 %v1410
    %2008 = vmatpush1.bf16.msra.mxu0 %v1409
    %2009 = vmatprep.mubr.bf16.mxu0 %v170
    %2010 = vmatmul.mubr.bf16.gmra.mrb[0].mxu0 %v169
    %v2011 = vpop.f32.mrb[0].mxu0
    %v2012 = vadd.f32 %v1971, %v2011
    %v2013 = vpop.f32.mrb[0].mxu0
    %v2014 = vadd.f32 %v1973, %v2013
    %v2015 = vpop.f32.mrb[0].mxu0
    %v2016 = vpop.f32.mrb[0].mxu0
    %2017 = vdwg.mxu0
    %2018 = vmatprep.subr.bf16.mxu0 %v1414
    %2019 = vmatpush1.bf16.msra.mxu0 %v1413
    %2020 = vmatprep.subr.bf16.mxu0 %v1418
    %2021 = vmatpush1.bf16.msra.mxu0 %v1417
    %2022 = vmatprep.subr.bf16.mxu0 %v1422
    %2023 = vmatpush1.bf16.msra.mxu0 %v1421
    %2024 = vmatprep.subr.bf16.mxu0 %v1426
    %2025 = vmatpush1.bf16.msra.mxu0 %v1425
    %2026 = vmatprep.subr.bf16.mxu0 %v1430
    %2027 = vmatpush1.bf16.msra.mxu0 %v1429
    %2028 = vmatprep.subr.bf16.mxu0 %v1434
    %2029 = vmatpush1.bf16.msra.mxu0 %v1433
    %2030 = vmatprep.subr.bf16.mxu0 %v1438
    %2031 = vmatpush1.bf16.msra.mxu0 %v1437
    %2032 = vmatprep.subr.bf16.mxu0 %v1442
    %2033 = vmatpush1.bf16.msra.mxu0 %v1441
    %2034 = vmatprep.subr.bf16.mxu0 %v1446
    %2035 = vmatpush1.bf16.msra.mxu0 %v1445
    %2036 = vmatprep.subr.bf16.mxu0 %v1450
    %2037 = vmatpush1.bf16.msra.mxu0 %v1449
    %2038 = vmatprep.subr.bf16.mxu0 %v1454
    %2039 = vmatpush1.bf16.msra.mxu0 %v1453
    %2040 = vmatprep.subr.bf16.mxu0 %v1458
    %2041 = vmatpush1.bf16.msra.mxu0 %v1457
    %2042 = vmatprep.subr.bf16.mxu0 %v1462
    %2043 = vmatpush1.bf16.msra.mxu0 %v1461
    %2044 = vmatprep.subr.bf16.mxu0 %v1466
    %2045 = vmatpush1.bf16.msra.mxu0 %v1465
    %2046 = vmatprep.subr.bf16.mxu0 %v1470
    %2047 = vmatpush1.bf16.msra.mxu0 %v1469
    %2048 = vmatprep.subr.bf16.mxu0 %v1474
    %2049 = vmatpush1.bf16.msra.mxu0 %v1473
    %2050 = vmatprep.mubr.bf16.mxu0 %v172
    %2051 = vmatmul.mubr.bf16.gmra.mrb[0].mxu0 %v171
    %v2052 = vpop.f32.mrb[0].mxu0
    %v2053 = vadd.f32 %v2012, %v2052
    %v2054 = vpop.f32.mrb[0].mxu0
    %v2055 = vadd.f32 %v2014, %v2054
    %v2056 = vpop.f32.mrb[0].mxu0
    %v2057 = vpop.f32.mrb[0].mxu0
    %2058 = vdwg.mxu0
    %v2059 = vmax.f32 %v1889, 0.0
    %v2060 = vmax.f32 %v1891, 0.0
    %v2061 = vmax.f32 %v2053, 0.0
    %v2062 = vmax.f32 %v2055, 0.0
    %v2063 = vpack.c.bf16 %v2059, %v2059
    %v2064 = vpack.c.bf16 %v2060, %v2060
    %v2065 = vpack.c.bf16 %v2061, %v2061
    %v2066 = vpack.c.bf16 %v2062, %v2062
    %v2067 = vld [vmem:[#allocation5] sm:$0xff]
    %v2068 = vld [vmem:[#allocation5 + $0x8] sm:$0xff]
    %v2069 = vld [vmem:[#allocation5 + $0x10] sm:$0xff]
    %v2070 = vld [vmem:[#allocation5 + $0x18] sm:$0xff]
    %v2071 = vld [vmem:[#allocation5 + $0x20] sm:$0xff]
    %v2072 = vld [vmem:[#allocation5 + $0x28] sm:$0xff]
    %v2073 = vld [vmem:[#allocation5 + $0x30] sm:$0xff]
    %v2074 = vld [vmem:[#allocation5 + $0x38] sm:$0xff]
    %v2075 = vld [vmem:[#allocation5 + $0x40] sm:$0xff]
    %v2076 = vld [vmem:[#allocation5 + $0x48] sm:$0xff]
    %v2077 = vld [vmem:[#allocation5 + $0x50] sm:$0xff]
    %v2078 = vld [vmem:[#allocation5 + $0x58] sm:$0xff]
    %v2079 = vld [vmem:[#allocation5 + $0x60] sm:$0xff]
    %v2080 = vld [vmem:[#allocation5 + $0x68] sm:$0xff]
    %v2081 = vld [vmem:[#allocation5 + $0x70] sm:$0xff]
    %v2082 = vld [vmem:[#allocation5 + $0x78] sm:$0xff]
    %v2083 = vld [vmem:[#allocation5 + $0x80] sm:$0xff]
    %v2084 = vld [vmem:[#allocation5 + $0x88] sm:$0xff]
    %v2085 = vld [vmem:[#allocation5 + $0x90] sm:$0xff]
    %v2086 = vld [vmem:[#allocation5 + $0x98] sm:$0xff]
    %v2087 = vld [vmem:[#allocation5 + $0xa0] sm:$0xff]
    %v2088 = vld [vmem:[#allocation5 + $0xa8] sm:$0xff]
    %v2089 = vld [vmem:[#allocation5 + $0xb0] sm:$0xff]
    %v2090 = vld [vmem:[#allocation5 + $0xb8] sm:$0xff]
    %v2091 = vld [vmem:[#allocation5 + $0xc0] sm:$0xff]
    %v2092 = vld [vmem:[#allocation5 + $0xc8] sm:$0xff]
    %v2093 = vld [vmem:[#allocation5 + $0xd0] sm:$0xff]
    %v2094 = vld [vmem:[#allocation5 + $0xd8] sm:$0xff]
    %v2095 = vld [vmem:[#allocation5 + $0xe0] sm:$0xff]
    %v2096 = vld [vmem:[#allocation5 + $0xe8] sm:$0xff]
    %v2097 = vld [vmem:[#allocation5 + $0xf0] sm:$0xff]
    %v2098 = vld [vmem:[#allocation5 + $0xf8] sm:$0xff]
    %v2099 = vld [vmem:[#allocation5 + $0x100] sm:$0xff]
    %v2100 = vld [vmem:[#allocation5 + $0x108] sm:$0xff]
    %v2101 = vld [vmem:[#allocation5 + $0x110] sm:$0xff]
    %v2102 = vld [vmem:[#allocation5 + $0x118] sm:$0xff]
    %v2103 = vld [vmem:[#allocation5 + $0x120] sm:$0xff]
    %v2104 = vld [vmem:[#allocation5 + $0x128] sm:$0xff]
    %v2105 = vld [vmem:[#allocation5 + $0x130] sm:$0xff]
    %v2106 = vld [vmem:[#allocation5 + $0x138] sm:$0xff]
    %v2107 = vld [vmem:[#allocation5 + $0x140] sm:$0xff]
    %v2108 = vld [vmem:[#allocation5 + $0x148] sm:$0xff]
    %v2109 = vld [vmem:[#allocation5 + $0x150] sm:$0xff]
    %v2110 = vld [vmem:[#allocation5 + $0x158] sm:$0xff]
    %v2111 = vld [vmem:[#allocation5 + $0x160] sm:$0xff]
    %v2112 = vld [vmem:[#allocation5 + $0x168] sm:$0xff]
    %v2113 = vld [vmem:[#allocation5 + $0x170] sm:$0xff]
    %v2114 = vld [vmem:[#allocation5 + $0x178] sm:$0xff]
    %v2115 = vld [vmem:[#allocation5 + $0x180] sm:$0xff]
    %v2116 = vld [vmem:[#allocation5 + $0x188] sm:$0xff]
    %v2117 = vld [vmem:[#allocation5 + $0x190] sm:$0xff]
    %v2118 = vld [vmem:[#allocation5 + $0x198] sm:$0xff]
    %v2119 = vld [vmem:[#allocation5 + $0x1a0] sm:$0xff]
    %v2120 = vld [vmem:[#allocation5 + $0x1a8] sm:$0xff]
    %v2121 = vld [vmem:[#allocation5 + $0x1b0] sm:$0xff]
    %v2122 = vld [vmem:[#allocation5 + $0x1b8] sm:$0xff]
    %v2123 = vld [vmem:[#allocation5 + $0x1c0] sm:$0xff]
    %v2124 = vld [vmem:[#allocation5 + $0x1c8] sm:$0xff]
    %v2125 = vld [vmem:[#allocation5 + $0x1d0] sm:$0xff]
    %v2126 = vld [vmem:[#allocation5 + $0x1d8] sm:$0xff]
    %v2127 = vld [vmem:[#allocation5 + $0x1e0] sm:$0xff]
    %v2128 = vld [vmem:[#allocation5 + $0x1e8] sm:$0xff]
    %v2129 = vld [vmem:[#allocation5 + $0x1f0] sm:$0xff]
    %v2130 = vld [vmem:[#allocation5 + $0x1f8] sm:$0xff]
    %v2131 = vld [vmem:[%s4] sm:$0x3]
    %v2133 = vlaneseq
    %v2134 = vshrl.u32 %v2133, 7
    %v2135 = vsub.s32 0, %v2134
    %v2136 = vrot.slane %v2131, %v2135
    %v2137 = vlaneseq
    %v2138 = vshrl.u32 %v2137, 7
    %v2139 = vsub.s32 1, %v2138
    %v2140 = vrot.slane %v2131, %v2139
    %v2207 = vunpack.c.l.b16 %v2067
    %v2208 = vunpack.c.h.b16 %v2067
    %v2209 = vunpack.c.l.b16 %v2068
    %v2210 = vunpack.c.h.b16 %v2068
    %v2211 = vunpack.c.l.b16 %v2069
    %v2212 = vunpack.c.h.b16 %v2069
    %v2213 = vunpack.c.l.b16 %v2070
    %v2214 = vunpack.c.h.b16 %v2070
    %v2215 = vunpack.c.l.b16 %v2071
    %v2216 = vunpack.c.h.b16 %v2071
    %v2217 = vunpack.c.l.b16 %v2072
    %v2218 = vunpack.c.h.b16 %v2072
    %v2219 = vunpack.c.l.b16 %v2073
    %v2220 = vunpack.c.h.b16 %v2073
    %v2221 = vunpack.c.l.b16 %v2074
    %v2222 = vunpack.c.h.b16 %v2074
    %v2223 = vunpack.c.l.b16 %v2075
    %v2224 = vunpack.c.h.b16 %v2075
    %v2225 = vunpack.c.l.b16 %v2076
    %v2226 = vunpack.c.h.b16 %v2076
    %v2227 = vunpack.c.l.b16 %v2077
    %v2228 = vunpack.c.h.b16 %v2077
    %v2229 = vunpack.c.l.b16 %v2078
    %v2230 = vunpack.c.h.b16 %v2078
    %v2231 = vunpack.c.l.b16 %v2079
    %v2232 = vunpack.c.h.b16 %v2079
    %v2233 = vunpack.c.l.b16 %v2080
    %v2234 = vunpack.c.h.b16 %v2080
    %v2235 = vunpack.c.l.b16 %v2081
    %v2236 = vunpack.c.h.b16 %v2081
    %v2237 = vunpack.c.l.b16 %v2082
    %v2238 = vunpack.c.h.b16 %v2082
    %v2239 = vunpack.c.l.b16 %v2083
    %v2240 = vunpack.c.h.b16 %v2083
    %v2241 = vunpack.c.l.b16 %v2084
    %v2242 = vunpack.c.h.b16 %v2084
    %v2243 = vunpack.c.l.b16 %v2085
    %v2244 = vunpack.c.h.b16 %v2085
    %v2245 = vunpack.c.l.b16 %v2086
    %v2246 = vunpack.c.h.b16 %v2086
    %v2247 = vunpack.c.l.b16 %v2087
    %v2248 = vunpack.c.h.b16 %v2087
    %v2249 = vunpack.c.l.b16 %v2088
    %v2250 = vunpack.c.h.b16 %v2088
    %v2251 = vunpack.c.l.b16 %v2089
    %v2252 = vunpack.c.h.b16 %v2089
    %v2253 = vunpack.c.l.b16 %v2090
    %v2254 = vunpack.c.h.b16 %v2090
    %v2255 = vunpack.c.l.b16 %v2091
    %v2256 = vunpack.c.h.b16 %v2091
    %v2257 = vunpack.c.l.b16 %v2092
    %v2258 = vunpack.c.h.b16 %v2092
    %v2259 = vunpack.c.l.b16 %v2093
    %v2260 = vunpack.c.h.b16 %v2093
    %v2261 = vunpack.c.l.b16 %v2094
    %v2262 = vunpack.c.h.b16 %v2094
    %v2263 = vunpack.c.l.b16 %v2095
    %v2264 = vunpack.c.h.b16 %v2095
    %v2265 = vunpack.c.l.b16 %v2096
    %v2266 = vunpack.c.h.b16 %v2096
    %v2267 = vunpack.c.l.b16 %v2097
    %v2268 = vunpack.c.h.b16 %v2097
    %v2269 = vunpack.c.l.b16 %v2098
    %v2270 = vunpack.c.h.b16 %v2098
    %v2271 = vunpack.c.l.b16 %v2099
    %v2272 = vunpack.c.h.b16 %v2099
    %v2273 = vunpack.c.l.b16 %v2100
    %v2274 = vunpack.c.h.b16 %v2100
    %v2275 = vunpack.c.l.b16 %v2101
    %v2276 = vunpack.c.h.b16 %v2101
    %v2277 = vunpack.c.l.b16 %v2102
    %v2278 = vunpack.c.h.b16 %v2102
    %v2279 = vunpack.c.l.b16 %v2103
    %v2280 = vunpack.c.h.b16 %v2103
    %v2281 = vunpack.c.l.b16 %v2104
    %v2282 = vunpack.c.h.b16 %v2104
    %v2283 = vunpack.c.l.b16 %v2105
    %v2284 = vunpack.c.h.b16 %v2105
    %v2285 = vunpack.c.l.b16 %v2106
    %v2286 = vunpack.c.h.b16 %v2106
    %v2287 = vunpack.c.l.b16 %v2107
    %v2288 = vunpack.c.h.b16 %v2107
    %v2289 = vunpack.c.l.b16 %v2108
    %v2290 = vunpack.c.h.b16 %v2108
    %v2291 = vunpack.c.l.b16 %v2109
    %v2292 = vunpack.c.h.b16 %v2109
    %v2293 = vunpack.c.l.b16 %v2110
    %v2294 = vunpack.c.h.b16 %v2110
    %v2295 = vunpack.c.l.b16 %v2111
    %v2296 = vunpack.c.h.b16 %v2111
    %v2297 = vunpack.c.l.b16 %v2112
    %v2298 = vunpack.c.h.b16 %v2112
    %v2299 = vunpack.c.l.b16 %v2113
    %v2300 = vunpack.c.h.b16 %v2113
    %v2301 = vunpack.c.l.b16 %v2114
    %v2302 = vunpack.c.h.b16 %v2114
    %v2303 = vunpack.c.l.b16 %v2115
    %v2304 = vunpack.c.h.b16 %v2115
    %v2305 = vunpack.c.l.b16 %v2116
    %v2306 = vunpack.c.h.b16 %v2116
    %v2307 = vunpack.c.l.b16 %v2117
    %v2308 = vunpack.c.h.b16 %v2117
    %v2309 = vunpack.c.l.b16 %v2118
    %v2310 = vunpack.c.h.b16 %v2118
    %v2311 = vunpack.c.l.b16 %v2119
    %v2312 = vunpack.c.h.b16 %v2119
    %v2313 = vunpack.c.l.b16 %v2120
    %v2314 = vunpack.c.h.b16 %v2120
    %v2315 = vunpack.c.l.b16 %v2121
    %v2316 = vunpack.c.h.b16 %v2121
    %v2317 = vunpack.c.l.b16 %v2122
    %v2318 = vunpack.c.h.b16 %v2122
    %v2319 = vunpack.c.l.b16 %v2123
    %v2320 = vunpack.c.h.b16 %v2123
    %v2321 = vunpack.c.l.b16 %v2124
    %v2322 = vunpack.c.h.b16 %v2124
    %v2323 = vunpack.c.l.b16 %v2125
    %v2324 = vunpack.c.h.b16 %v2125
    %v2325 = vunpack.c.l.b16 %v2126
    %v2326 = vunpack.c.h.b16 %v2126
    %v2327 = vunpack.c.l.b16 %v2127
    %v2328 = vunpack.c.h.b16 %v2127
    %v2329 = vunpack.c.l.b16 %v2128
    %v2330 = vunpack.c.h.b16 %v2128
    %v2331 = vunpack.c.l.b16 %v2129
    %v2332 = vunpack.c.h.b16 %v2129
    %v2333 = vunpack.c.l.b16 %v2130
    %v2334 = vunpack.c.h.b16 %v2130
    %v2335 = vpack.c.b16 %v2209, %v2207
    %v2336 = vpack.c.b16 %v2210, %v2208
    %v2337 = vpack.c.b16 %v2213, %v2211
    %v2338 = vpack.c.b16 %v2214, %v2212
    %v2339 = vpack.c.b16 %v2217, %v2215
    %v2340 = vpack.c.b16 %v2218, %v2216
    %v2341 = vpack.c.b16 %v2221, %v2219
    %v2342 = vpack.c.b16 %v2222, %v2220
    %v2343 = vpack.c.b16 %v2225, %v2223
    %v2344 = vpack.c.b16 %v2226, %v2224
    %v2345 = vpack.c.b16 %v2229, %v2227
    %v2346 = vpack.c.b16 %v2230, %v2228
    %v2347 = vpack.c.b16 %v2233, %v2231
    %v2348 = vpack.c.b16 %v2234, %v2232
    %v2349 = vpack.c.b16 %v2237, %v2235
    %v2350 = vpack.c.b16 %v2238, %v2236
    %v2351 = vpack.c.b16 %v2241, %v2239
    %v2352 = vpack.c.b16 %v2242, %v2240
    %v2353 = vpack.c.b16 %v2245, %v2243
    %v2354 = vpack.c.b16 %v2246, %v2244
    %v2355 = vpack.c.b16 %v2249, %v2247
    %v2356 = vpack.c.b16 %v2250, %v2248
    %v2357 = vpack.c.b16 %v2253, %v2251
    %v2358 = vpack.c.b16 %v2254, %v2252
    %v2359 = vpack.c.b16 %v2257, %v2255
    %v2360 = vpack.c.b16 %v2258, %v2256
    %v2361 = vpack.c.b16 %v2261, %v2259
    %v2362 = vpack.c.b16 %v2262, %v2260
    %v2363 = vpack.c.b16 %v2265, %v2263
    %v2364 = vpack.c.b16 %v2266, %v2264
    %v2365 = vpack.c.b16 %v2269, %v2267
    %v2366 = vpack.c.b16 %v2270, %v2268
    %v2367 = vpack.c.b16 %v2273, %v2271
    %v2368 = vpack.c.b16 %v2274, %v2272
    %v2369 = vpack.c.b16 %v2277, %v2275
    %v2370 = vpack.c.b16 %v2278, %v2276
    %v2371 = vpack.c.b16 %v2281, %v2279
    %v2372 = vpack.c.b16 %v2282, %v2280
    %v2373 = vpack.c.b16 %v2285, %v2283
    %v2374 = vpack.c.b16 %v2286, %v2284
    %v2375 = vpack.c.b16 %v2289, %v2287
    %v2376 = vpack.c.b16 %v2290, %v2288
    %v2377 = vpack.c.b16 %v2293, %v2291
    %v2378 = vpack.c.b16 %v2294, %v2292
    %v2379 = vpack.c.b16 %v2297, %v2295
    %v2380 = vpack.c.b16 %v2298, %v2296
    %v2381 = vpack.c.b16 %v2301, %v2299
    %v2382 = vpack.c.b16 %v2302, %v2300
    %v2383 = vpack.c.b16 %v2305, %v2303
    %v2384 = vpack.c.b16 %v2306, %v2304
    %v2385 = vpack.c.b16 %v2309, %v2307
    %v2386 = vpack.c.b16 %v2310, %v2308
    %v2387 = vpack.c.b16 %v2313, %v2311
    %v2388 = vpack.c.b16 %v2314, %v2312
    %v2389 = vpack.c.b16 %v2317, %v2315
    %v2390 = vpack.c.b16 %v2318, %v2316
    %v2391 = vpack.c.b16 %v2321, %v2319
    %v2392 = vpack.c.b16 %v2322, %v2320
    %v2393 = vpack.c.b16 %v2325, %v2323
    %v2394 = vpack.c.b16 %v2326, %v2324
    %v2395 = vpack.c.b16 %v2329, %v2327
    %v2396 = vpack.c.b16 %v2330, %v2328
    %v2397 = vpack.c.b16 %v2333, %v2331
    %v2398 = vpack.c.b16 %v2334, %v2332
    %2463 = vmatprep.subr.bf16.mxu0 %v2336
    %2464 = vmatpush1.bf16.msra.mxu0 %v2335
    %2465 = vmatprep.subr.bf16.mxu0 %v2338
    %2466 = vmatpush1.bf16.msra.mxu0 %v2337
    %2467 = vmatprep.subr.bf16.mxu0 %v2340
    %2468 = vmatpush1.bf16.msra.mxu0 %v2339
    %2469 = vmatprep.subr.bf16.mxu0 %v2342
    %2470 = vmatpush1.bf16.msra.mxu0 %v2341
    %2471 = vmatprep.subr.bf16.mxu0 %v2344
    %2472 = vmatpush1.bf16.msra.mxu0 %v2343
    %2473 = vmatprep.subr.bf16.mxu0 %v2346
    %2474 = vmatpush1.bf16.msra.mxu0 %v2345
    %2475 = vmatprep.subr.bf16.mxu0 %v2348
    %2476 = vmatpush1.bf16.msra.mxu0 %v2347
    %2477 = vmatprep.subr.bf16.mxu0 %v2350
    %2478 = vmatpush1.bf16.msra.mxu0 %v2349
    %2479 = vmatprep.subr.bf16.mxu0 %v2352
    %2480 = vmatpush1.bf16.msra.mxu0 %v2351
    %2481 = vmatprep.subr.bf16.mxu0 %v2354
    %2482 = vmatpush1.bf16.msra.mxu0 %v2353
    %2483 = vmatprep.subr.bf16.mxu0 %v2356
    %2484 = vmatpush1.bf16.msra.mxu0 %v2355
    %2485 = vmatprep.subr.bf16.mxu0 %v2358
    %2486 = vmatpush1.bf16.msra.mxu0 %v2357
    %2487 = vmatprep.subr.bf16.mxu0 %v2360
    %2488 = vmatpush1.bf16.msra.mxu0 %v2359
    %2489 = vmatprep.subr.bf16.mxu0 %v2362
    %2490 = vmatpush1.bf16.msra.mxu0 %v2361
    %2491 = vmatprep.subr.bf16.mxu0 %v2364
    %2492 = vmatpush1.bf16.msra.mxu0 %v2363
    %2493 = vmatprep.subr.bf16.mxu0 %v2366
    %2494 = vmatpush1.bf16.msra.mxu0 %v2365
    %2495 = vmatprep.mubr.bf16.mxu0 %v2064
    %2496 = vmatmul.mubr.bf16.gmra.mrb[0].mxu0 %v2063
    %v2497 = vpop.f32.mrb[0].mxu0
    %v2498 = vadd.f32 %v2136, %v2497
    %v2499 = vpop.f32.mrb[0].mxu0
    %v2500 = vadd.f32 %v2140, %v2499
    %v2501 = vpop.f32.mrb[0].mxu0
    %v2502 = vpop.f32.mrb[0].mxu0
    %2503 = vdwg.mxu0
    %2504 = vmatprep.subr.bf16.mxu0 %v2368
    %2505 = vmatpush1.bf16.msra.mxu0 %v2367
    %2506 = vmatprep.subr.bf16.mxu0 %v2370
    %2507 = vmatpush1.bf16.msra.mxu0 %v2369
    %2508 = vmatprep.subr.bf16.mxu0 %v2372
    %2509 = vmatpush1.bf16.msra.mxu0 %v2371
    %2510 = vmatprep.subr.bf16.mxu0 %v2374
    %2511 = vmatpush1.bf16.msra.mxu0 %v2373
    %2512 = vmatprep.subr.bf16.mxu0 %v2376
    %2513 = vmatpush1.bf16.msra.mxu0 %v2375
    %2514 = vmatprep.subr.bf16.mxu0 %v2378
    %2515 = vmatpush1.bf16.msra.mxu0 %v2377
    %2516 = vmatprep.subr.bf16.mxu0 %v2380
    %2517 = vmatpush1.bf16.msra.mxu0 %v2379
    %2518 = vmatprep.subr.bf16.mxu0 %v2382
    %2519 = vmatpush1.bf16.msra.mxu0 %v2381
    %2520 = vmatprep.subr.bf16.mxu0 %v2384
    %2521 = vmatpush1.bf16.msra.mxu0 %v2383
    %2522 = vmatprep.subr.bf16.mxu0 %v2386
    %2523 = vmatpush1.bf16.msra.mxu0 %v2385
    %2524 = vmatprep.subr.bf16.mxu0 %v2388
    %2525 = vmatpush1.bf16.msra.mxu0 %v2387
    %2526 = vmatprep.subr.bf16.mxu0 %v2390
    %2527 = vmatpush1.bf16.msra.mxu0 %v2389
    %2528 = vmatprep.subr.bf16.mxu0 %v2392
    %2529 = vmatpush1.bf16.msra.mxu0 %v2391
    %2530 = vmatprep.subr.bf16.mxu0 %v2394
    %2531 = vmatpush1.bf16.msra.mxu0 %v2393
    %2532 = vmatprep.subr.bf16.mxu0 %v2396
    %2533 = vmatpush1.bf16.msra.mxu0 %v2395
    %2534 = vmatprep.subr.bf16.mxu0 %v2398
    %2535 = vmatpush1.bf16.msra.mxu0 %v2397
    %2536 = vmatprep.mubr.bf16.mxu0 %v2066
    %2537 = vmatmul.mubr.bf16.gmra.mrb[0].mxu0 %v2065
    %v2538 = vpop.f32.mrb[0].mxu0
    %v2539 = vadd.f32 %v2498, %v2538
    %v2540 = vpop.f32.mrb[0].mxu0
    %v2541 = vadd.f32 %v2500, %v2540
    %v2542 = vpop.f32.mrb[0].mxu0
    %v2543 = vpop.f32.mrb[0].mxu0
    %2544 = vdwg.mxu0
    %v2545 = vmax.f32 %v2539, 0.0
    %v2546 = vmax.f32 %v2541, 0.0
    %v2547 = vpack.c.bf16 %v2545, %v2545
    %v2548 = vpack.c.bf16 %v2546, %v2546
    %v2549 = vld [vmem:[#allocation7] sm:$0xf]
    %v2550 = vld [vmem:[#allocation7 + $0x4] sm:$0xf]
    %v2551 = vld [vmem:[#allocation7 + $0x8] sm:$0xf]
    %v2552 = vld [vmem:[#allocation7 + $0xc] sm:$0xf]
    %v2553 = vld [vmem:[#allocation7 + $0x10] sm:$0xf]
    %v2554 = vld [vmem:[#allocation7 + $0x14] sm:$0xf]
    %v2555 = vld [vmem:[#allocation7 + $0x18] sm:$0xf]
    %v2556 = vld [vmem:[#allocation7 + $0x1c] sm:$0xf]
    %v2557 = vld [vmem:[#allocation7 + $0x20] sm:$0xf]
    %v2558 = vld [vmem:[#allocation7 + $0x24] sm:$0xf]
    %v2559 = vld [vmem:[#allocation7 + $0x28] sm:$0xf]
    %v2560 = vld [vmem:[#allocation7 + $0x2c] sm:$0xf]
    %v2561 = vld [vmem:[#allocation7 + $0x30] sm:$0xf]
    %v2562 = vld [vmem:[#allocation7 + $0x34] sm:$0xf]
    %v2563 = vld [vmem:[#allocation7 + $0x38] sm:$0xf]
    %v2564 = vld [vmem:[#allocation7 + $0x3c] sm:$0xf]
    %v2565 = vld [vmem:[#allocation7 + $0x40] sm:$0xf]
    %v2566 = vld [vmem:[#allocation7 + $0x44] sm:$0xf]
    %v2567 = vld [vmem:[#allocation7 + $0x48] sm:$0xf]
    %v2568 = vld [vmem:[#allocation7 + $0x4c] sm:$0xf]
    %v2569 = vld [vmem:[#allocation7 + $0x50] sm:$0xf]
    %v2570 = vld [vmem:[#allocation7 + $0x54] sm:$0xf]
    %v2571 = vld [vmem:[#allocation7 + $0x58] sm:$0xf]
    %v2572 = vld [vmem:[#allocation7 + $0x5c] sm:$0xf]
    %v2573 = vld [vmem:[#allocation7 + $0x60] sm:$0xf]
    %v2574 = vld [vmem:[#allocation7 + $0x64] sm:$0xf]
    %v2575 = vld [vmem:[#allocation7 + $0x68] sm:$0xf]
    %v2576 = vld [vmem:[#allocation7 + $0x6c] sm:$0xf]
    %v2577 = vld [vmem:[#allocation7 + $0x70] sm:$0xf]
    %v2578 = vld [vmem:[#allocation7 + $0x74] sm:$0xf]
    %v2579 = vld [vmem:[#allocation7 + $0x78] sm:$0xf]
    %v2580 = vld [vmem:[#allocation7 + $0x7c] sm:$0xf]
    %v2581 = vld [vmem:[%s6] sm:$0x1]
    %v2583 = vlaneseq
    %v2584 = vshrl.u32 %v2583, 7
    %v2585 = vsub.s32 0, %v2584
    %v2586 = vrot.slane %v2581, %v2585
    %v2620 = vunpack.c.l.b16 %v2549
    %v2621 = vunpack.c.l.b16 %v2550
    %v2622 = vunpack.c.l.b16 %v2551
    %v2623 = vunpack.c.l.b16 %v2552
    %v2624 = vunpack.c.l.b16 %v2553
    %v2625 = vunpack.c.l.b16 %v2554
    %v2626 = vunpack.c.l.b16 %v2555
    %v2627 = vunpack.c.l.b16 %v2556
    %v2628 = vunpack.c.l.b16 %v2557
    %v2629 = vunpack.c.l.b16 %v2558
    %v2630 = vunpack.c.l.b16 %v2559
    %v2631 = vunpack.c.l.b16 %v2560
    %v2632 = vunpack.c.l.b16 %v2561
    %v2633 = vunpack.c.l.b16 %v2562
    %v2634 = vunpack.c.l.b16 %v2563
    %v2635 = vunpack.c.l.b16 %v2564
    %v2636 = vunpack.c.l.b16 %v2565
    %v2637 = vunpack.c.l.b16 %v2566
    %v2638 = vunpack.c.l.b16 %v2567
    %v2639 = vunpack.c.l.b16 %v2568
    %v2640 = vunpack.c.l.b16 %v2569
    %v2641 = vunpack.c.l.b16 %v2570
    %v2642 = vunpack.c.l.b16 %v2571
    %v2643 = vunpack.c.l.b16 %v2572
    %v2644 = vunpack.c.l.b16 %v2573
    %v2645 = vunpack.c.l.b16 %v2574
    %v2646 = vunpack.c.l.b16 %v2575
    %v2647 = vunpack.c.l.b16 %v2576
    %v2648 = vunpack.c.l.b16 %v2577
    %v2649 = vunpack.c.l.b16 %v2578
    %v2650 = vunpack.c.l.b16 %v2579
    %v2651 = vunpack.c.l.b16 %v2580
    %v2652 = vpack.c.b16 %v2621, %v2620
    %v2653 = vpack.c.b16 %v2623, %v2622
    %v2654 = vpack.c.b16 %v2625, %v2624
    %v2655 = vpack.c.b16 %v2627, %v2626
    %v2656 = vpack.c.b16 %v2629, %v2628
    %v2657 = vpack.c.b16 %v2631, %v2630
    %v2658 = vpack.c.b16 %v2633, %v2632
    %v2659 = vpack.c.b16 %v2635, %v2634
    %v2660 = vpack.c.b16 %v2637, %v2636
    %v2661 = vpack.c.b16 %v2639, %v2638
    %v2662 = vpack.c.b16 %v2641, %v2640
    %v2663 = vpack.c.b16 %v2643, %v2642
    %v2664 = vpack.c.b16 %v2645, %v2644
    %v2665 = vpack.c.b16 %v2647, %v2646
    %v2666 = vpack.c.b16 %v2649, %v2648
    %v2667 = vpack.c.b16 %v2651, %v2650
    %2684 = vmatprep.subr.bf16.mxu0 0
    %2685 = vmatpush1.bf16.msra.mxu0 %v2652
    %2686 = vmatprep.subr.bf16.mxu0 0
    %2687 = vmatpush1.bf16.msra.mxu0 %v2653
    %2688 = vmatprep.subr.bf16.mxu0 0
    %2689 = vmatpush1.bf16.msra.mxu0 %v2654
    %2690 = vmatprep.subr.bf16.mxu0 0
    %2691 = vmatpush1.bf16.msra.mxu0 %v2655
    %2692 = vmatprep.subr.bf16.mxu0 0
    %2693 = vmatpush1.bf16.msra.mxu0 %v2656
    %2694 = vmatprep.subr.bf16.mxu0 0
    %2695 = vmatpush1.bf16.msra.mxu0 %v2657
    %2696 = vmatprep.subr.bf16.mxu0 0
    %2697 = vmatpush1.bf16.msra.mxu0 %v2658
    %2698 = vmatprep.subr.bf16.mxu0 0
    %2699 = vmatpush1.bf16.msra.mxu0 %v2659
    %2700 = vmatprep.subr.bf16.mxu0 0
    %2701 = vmatpush1.bf16.msra.mxu0 %v2660
    %2702 = vmatprep.subr.bf16.mxu0 0
    %2703 = vmatpush1.bf16.msra.mxu0 %v2661
    %2704 = vmatprep.subr.bf16.mxu0 0
    %2705 = vmatpush1.bf16.msra.mxu0 %v2662
    %2706 = vmatprep.subr.bf16.mxu0 0
    %2707 = vmatpush1.bf16.msra.mxu0 %v2663
    %2708 = vmatprep.subr.bf16.mxu0 0
    %2709 = vmatpush1.bf16.msra.mxu0 %v2664
    %2710 = vmatprep.subr.bf16.mxu0 0
    %2711 = vmatpush1.bf16.msra.mxu0 %v2665
    %2712 = vmatprep.subr.bf16.mxu0 0
    %2713 = vmatpush1.bf16.msra.mxu0 %v2666
    %2714 = vmatprep.subr.bf16.mxu0 0
    %2715 = vmatpush1.bf16.msra.mxu0 %v2667
    %2716 = vmatprep.mubr.bf16.mxu0 %v2548
    %2717 = vmatmul.mubr.bf16.gmra.mrb[0].mxu0 %v2547
    %v2718 = vpop.f32.mrb[0].mxu0
    %v2719 = vadd.f32 %v2586, %v2718
    %v2720 = vpop.f32.mrb[0].mxu0
    %v2721 = vpop.f32.mrb[0].mxu0
    %v2722 = vpop.f32.mrb[0].mxu0
    %2723 = vdwg.mxu0
    %v2724 = vmax.f32 %v2719, 0.0
    %2725 = vst [vmem:[#allocation8] sm:$0xff] %v2724
    // Predicated region
    $region42: #{encoder_mlp_forward.1} parent=1 // pred_check
      _
    $region43: #{encoder_mlp_forward.1} parent=1 // pred_check_branch
      %2727 = sbr.rel (0) target = $region45
    $region44: #{encoder_mlp_forward.1} parent=1 // pred_region
      %s2729 = ssub.s32 128, 32
      %2730 = vsyncadd [#allocation4], %s2729
      %s2731 = sshll.u32 [#allocation8], 4
      %s2732 = int_to_ptr.vmem [resolvable:$true] %s2731
      %2737 = dma.vmem_to_hbm [thread:$0]  %s2732, 32, %s7, [#allocation4], 32, 32, 2
    $region45: #{encoder_mlp_forward.1} parent=1 // pred_fallthru
      _
    // Predicated region
    $region46: #{encoder_mlp_forward.1} parent=1 // pred_check
      _
    $region47: #{encoder_mlp_forward.1} parent=1 // pred_check_branch
      %2739 = sbr.rel (0) target = $region49
    $region48: #{encoder_mlp_forward.1} parent=1 // pred_region
      %2740 = dma.done [#allocation4], 128
    $region49: #{encoder_mlp_forward.1} parent=1 // pred_fallthru
      _
    %2741 = vsyncpa [#allocation3], 1
    %2742 = vsyncpa [#allocation6], 1
    %2743 = vsyncpa [#allocation4], 1

</llo_original>
